<compile_context>
chip_gen: v7x
topology: tpu7x:2x2x1
jax: 0.10.0
libtpu: 0.0.40
codegen_flags: <defaults>
</compile_context>

<pallas_src>
import functools

import jax
import jax.numpy as jnp
from jax import lax
from jax.experimental import pallas as pl
from jax.experimental.pallas import tpu as pltpu


def _round_up(x, m):
    return (x + m - 1) // m * m


def _rbm_kernel(v_ref, wt_ref, w_ref, hb_ref, vb_ref, uh_ref, uv_ref, out_ref, *, k):
    # v_ref:  (TB, n_visible)            batch tile of visible units
    # wt_ref: (n_visible, n_hidden) bf16 pre-transposed weights (hoisted out of loop)
    # w_ref:  (n_hidden, n_visible) bf16
    # hb_ref: (1, n_hidden) f32 ; vb_ref: (1, n_visible) f32
    # uh_ref: (k, TB, n_hidden) f32 ; uv_ref: (k, TB, n_visible) f32  (uniform thresholds)
    Wt = wt_ref[...]
    W = w_ref[...]
    hb = hb_ref[...]
    vb = vb_ref[...]
    v0 = v_ref[...].astype(jnp.bfloat16)          # {0,1} is exact in bf16

    def gibbs_step(step, v):
        # hidden | visible : v @ W.T + h_bias   (bf16 MXU, f32 accumulate)
        pre_h = jnp.dot(v, Wt, preferred_element_type=jnp.float32) + hb
        p_h = jax.nn.sigmoid(pre_h)               # f32 elementwise (v5e-safe)
        h = (p_h > uh_ref[step]).astype(jnp.bfloat16)   # sample = 1[p > u]

        # visible | hidden : h @ W + v_bias
        pre_v = jnp.dot(h, W, preferred_element_type=jnp.float32) + vb
        p_v = jax.nn.sigmoid(pre_v)
        v_new = (p_v > uv_ref[step]).astype(jnp.bfloat16)
        return v_new

    v_k = lax.fori_loop(0, k, gibbs_step, v0, unroll=True)
    out_ref[...] = v_k.astype(out_ref.dtype)


def rbm_forward(v, W, h_bias, v_bias, key, *, k=5, block_batch=None):
    """v: (B, n_visible); W: (n_hidden, n_visible); biases 1-D; key: jax PRNG key."""
    v = jnp.asarray(v, jnp.float32)
    W = jnp.asarray(W, jnp.float32)
    B, n_visible = v.shape
    n_hidden = W.shape[0]
    # Keep lane dims dense (multiples of 128).  For ragged models (e.g. 784 visible
    # units), zero-pad W / biases / v to the next multiple of 128 in the caller;
    # zero-padded units decouple from the chain and can be sliced off afterwards.
    assert n_visible % 128 == 0 and n_hidden % 128 == 0, (
        "pad n_visible / n_hidden to multiples of 128 before calling")

    # Batch tile: big enough to feed the MXU, multiple of 8 (sublane).
    if block_batch is None:
        block_batch = 256 if B >= 256 else _round_up(max(B, 8), 8)
    TB = int(block_batch)
    assert TB % 8 == 0
    B_pad = _round_up(B, TB)
    if B_pad != B:
        v = jnp.pad(v, ((0, B_pad - B), (0, 0)))

    # Bernoulli thresholds drawn once in the wrapper (portable PRNG).  Each batch
    # tile reads its own slice, so grid blocks / cores never replay a stream.
    kh, kv = jax.random.split(key)
    u_h = jax.random.uniform(kh, (k, B_pad, n_hidden), dtype=jnp.float32)
    u_v = jax.random.uniform(kv, (k, B_pad, n_visible), dtype=jnp.float32)

    W_bf16 = W.astype(jnp.bfloat16)
    Wt_bf16 = W.T.astype(jnp.bfloat16)            # transpose hoisted out of the kernel
    hb2 = jnp.asarray(h_bias, jnp.float32).reshape(1, n_hidden)
    vb2 = jnp.asarray(v_bias, jnp.float32).reshape(1, n_visible)

    # Rough VMEM budget: resident weights/biases + double-buffered per-tile blocks.
    resident = 2 * n_hidden * n_visible * 2 + (n_hidden + n_visible) * 4
    per_tile = (TB * n_visible * 4 * 2
                + k * TB * (n_hidden + n_visible) * 4)
    vmem_limit = int(min(64 * 1024 * 1024,
                         max(32 * 1024 * 1024, 2 * (resident + 2 * per_tile))))

    out = pl.pallas_call(
        functools.partial(_rbm_kernel, k=k),
        out_shape=jax.ShapeDtypeStruct((B_pad, n_visible), jnp.float32),
        grid=(B_pad // TB,),
        in_specs=[
            pl.BlockSpec((TB, n_visible), lambda i: (i, 0)),         # v batch tile
            pl.BlockSpec((n_visible, n_hidden), lambda i: (0, 0)),   # Wt (resident)
            pl.BlockSpec((n_hidden, n_visible), lambda i: (0, 0)),   # W  (resident)
            pl.BlockSpec((1, n_hidden), lambda i: (0, 0)),           # h bias
            pl.BlockSpec((1, n_visible), lambda i: (0, 0)),          # v bias
            pl.BlockSpec((k, TB, n_hidden), lambda i: (0, i, 0)),    # uniforms for h
            pl.BlockSpec((k, TB, n_visible), lambda i: (0, i, 0)),   # uniforms for v
        ],
        out_specs=pl.BlockSpec((TB, n_visible), lambda i: (i, 0)),
        compiler_params=pltpu.CompilerParams(
            dimension_semantics=("parallel",),
            vmem_limit_bytes=vmem_limit),
    )(v, Wt_bf16, W_bf16, hb2, vb2, u_h, u_v)

    return out[:B]


if __name__ == "__main__":
    # Small deterministic demo (module __init__: W ~ 0.01 * rand, biases zero).
    n_visible, n_hidden, batch, k = 256, 128, 16, 5

    key = jax.random.PRNGKey(0)
    k_w, k_v, k_s = jax.random.split(key, 3)
    W = jax.random.normal(k_w, (n_hidden, n_visible), dtype=jnp.float32) * 0.01
    h_bias = jnp.zeros((n_hidden,), dtype=jnp.float32)
    v_bias = jnp.zeros((n_visible,), dtype=jnp.float32)

    # binary visible input
    v_in = (jax.random.uniform(k_v, (batch, n_visible)) > 0.5).astype(jnp.float32)

    # block_batch=8 exercises a 2-step batch grid at this demo size.
    out = rbm_forward(v_in, W, h_bias, v_bias, k_s, k=k, block_batch=8)
    out = jax.block_until_ready(out)

    assert out.shape == (batch, n_visible)
    assert out.dtype == jnp.float32
    # samples must be binary {0, 1}
    assert bool(jnp.all((out == 0.0) | (out == 1.0)))

    print("KERNEL_OK")
</pallas_src>

<mosaic_0001>
module attributes {stable_mosaic.version = 11 : i64} {
  func.func @_rbm_kernel(%arg0: i32, %arg1: memref<8x256xf32, #tpu.memory_space<vmem>>, %arg2: memref<256x128xbf16, #tpu.memory_space<vmem>>, %arg3: memref<128x256xbf16, #tpu.memory_space<vmem>>, %arg4: memref<1x128xf32, #tpu.memory_space<vmem>>, %arg5: memref<1x256xf32, #tpu.memory_space<vmem>>, %arg6: memref<5x8x128xf32, #tpu.memory_space<vmem>>, %arg7: memref<5x8x256xf32, #tpu.memory_space<vmem>>, %arg8: memref<8x256xf32, #tpu.memory_space<vmem>>) attributes {dimension_semantics = [#tpu.dimension_semantics<parallel>], iteration_bounds = array<i64: 2>, scalar_prefetch = 0 : i64, scratch_operands = 0 : i64, tpu.core_type = #tpu.core_type<tc>, window_params = [{transform_indices = @transform_0, window_bounds = array<i64: 8, 256>}, {pipeline_mode = #tpu.pipeline_mode<synchronous>, transform_indices = @transform_1, window_bounds = array<i64: 256, 128>}, {pipeline_mode = #tpu.pipeline_mode<synchronous>, transform_indices = @transform_2, window_bounds = array<i64: 128, 256>}, {pipeline_mode = #tpu.pipeline_mode<synchronous>, transform_indices = @transform_3, window_bounds = array<i64: 1, 128>}, {pipeline_mode = #tpu.pipeline_mode<synchronous>, transform_indices = @transform_4, window_bounds = array<i64: 1, 256>}, {transform_indices = @transform_5, window_bounds = array<i64: 5, 8, 128>}, {transform_indices = @transform_6, window_bounds = array<i64: 5, 8, 256>}, {transform_indices = @transform_7, window_bounds = array<i64: 8, 256>}]} {
    %c0 = arith.constant 0 : index
    %c0_0 = arith.constant 0 : index
    %0 = vector.load %arg2[%c0, %c0_0] : memref<256x128xbf16, #tpu.memory_space<vmem>>, vector<256x128xbf16>
    %c0_1 = arith.constant 0 : index
    %c0_2 = arith.constant 0 : index
    %1 = vector.load %arg3[%c0_1, %c0_2] : memref<128x256xbf16, #tpu.memory_space<vmem>>, vector<128x256xbf16>
    %c0_3 = arith.constant 0 : index
    %c0_4 = arith.constant 0 : index
    %2 = vector.load %arg4[%c0_3, %c0_4] : memref<1x128xf32, #tpu.memory_space<vmem>>, vector<1x128xf32>
    %c0_5 = arith.constant 0 : index
    %c0_6 = arith.constant 0 : index
    %3 = vector.load %arg5[%c0_5, %c0_6] : memref<1x256xf32, #tpu.memory_space<vmem>>, vector<1x256xf32>
    %c0_7 = arith.constant 0 : index
    %c0_8 = arith.constant 0 : index
    %4 = vector.load %arg1[%c0_7, %c0_8] : memref<8x256xf32, #tpu.memory_space<vmem>>, vector<8x256xf32>
    %5 = arith.truncf %4 : vector<8x256xf32> to vector<8x256xbf16>
    %c0_i32 = arith.constant 0 : i32
    %cst = arith.constant dense<0.000000e+00> : vector<8x128xf32>
    %6 = tpu.matmul %5, %0, %cst {dimension_numbers = #tpu.dot_dimension_numbers<[1], [0], [0], [1], [0, 0, 1, 1], [], []>} : vector<8x256xbf16>, vector<256x128xbf16>, vector<8x128xf32> -> vector<8x128xf32>
    %7 = vector.broadcast %2 : vector<1x128xf32> to vector<8x128xf32>
    %8 = arith.addf %6, %7 : vector<8x128xf32>
    %9 = arith.negf %8 : vector<8x128xf32>
    %10 = math.exp %9 : vector<8x128xf32>
    %cst_9 = arith.constant 1.000000e+00 : f32
    %11 = vector.broadcast %cst_9 : f32 to vector<8x128xf32>
    %12 = arith.addf %11, %10 : vector<8x128xf32>
    %13 = arith.divf %11, %12 : vector<8x128xf32>
    %14 = arith.index_cast %c0_i32 : i32 to index
    %c0_10 = arith.constant 0 : index
    %c0_11 = arith.constant 0 : index
    %15 = vector.load %arg6[%14, %c0_10, %c0_11] : memref<5x8x128xf32, #tpu.memory_space<vmem>>, vector<1x8x128xf32>
    %16 = vector.shape_cast %15 : vector<1x8x128xf32> to vector<8x128xf32>
    %17 = arith.cmpf ogt, %13, %16 : vector<8x128xf32>
    %18 = arith.extui %17 : vector<8x128xi1> to vector<8x128xi32>
    %19 = arith.sitofp %18 : vector<8x128xi32> to vector<8x128xf32>
    %20 = arith.truncf %19 : vector<8x128xf32> to vector<8x128xbf16>
    %cst_12 = arith.constant dense<0.000000e+00> : vector<8x256xf32>
    %21 = tpu.matmul %20, %1, %cst_12 {dimension_numbers = #tpu.dot_dimension_numbers<[1], [0], [0], [1], [0, 0, 1, 1], [], []>} : vector<8x128xbf16>, vector<128x256xbf16>, vector<8x256xf32> -> vector<8x256xf32>
    %22 = vector.broadcast %3 : vector<1x256xf32> to vector<8x256xf32>
    %23 = arith.addf %21, %22 : vector<8x256xf32>
    %24 = arith.negf %23 : vector<8x256xf32>
    %25 = math.exp %24 : vector<8x256xf32>
    %cst_13 = arith.constant 1.000000e+00 : f32
    %26 = vector.broadcast %cst_13 : f32 to vector<8x256xf32>
    %27 = arith.addf %26, %25 : vector<8x256xf32>
    %28 = arith.divf %26, %27 : vector<8x256xf32>
    %29 = arith.index_cast %c0_i32 : i32 to index
    %c0_14 = arith.constant 0 : index
    %c0_15 = arith.constant 0 : index
    %30 = vector.load %arg7[%29, %c0_14, %c0_15] : memref<5x8x256xf32, #tpu.memory_space<vmem>>, vector<1x8x256xf32>
    %31 = vector.shape_cast %30 : vector<1x8x256xf32> to vector<8x256xf32>
    %32 = arith.cmpf ogt, %28, %31 : vector<8x256xf32>
    %33 = arith.extui %32 : vector<8x256xi1> to vector<8x256xi32>
    %34 = arith.sitofp %33 : vector<8x256xi32> to vector<8x256xf32>
    %35 = arith.truncf %34 : vector<8x256xf32> to vector<8x256xbf16>
    %c1_i32 = arith.constant 1 : i32
    %cst_16 = arith.constant dense<0.000000e+00> : vector<8x128xf32>
    %36 = tpu.matmul %35, %0, %cst_16 {dimension_numbers = #tpu.dot_dimension_numbers<[1], [0], [0], [1], [0, 0, 1, 1], [], []>} : vector<8x256xbf16>, vector<256x128xbf16>, vector<8x128xf32> -> vector<8x128xf32>
    %37 = vector.broadcast %2 : vector<1x128xf32> to vector<8x128xf32>
    %38 = arith.addf %36, %37 : vector<8x128xf32>
    %39 = arith.negf %38 : vector<8x128xf32>
    %40 = math.exp %39 : vector<8x128xf32>
    %cst_17 = arith.constant 1.000000e+00 : f32
    %41 = vector.broadcast %cst_17 : f32 to vector<8x128xf32>
    %42 = arith.addf %41, %40 : vector<8x128xf32>
    %43 = arith.divf %41, %42 : vector<8x128xf32>
    %44 = arith.index_cast %c1_i32 : i32 to index
    %c0_18 = arith.constant 0 : index
    %c0_19 = arith.constant 0 : index
    %45 = vector.load %arg6[%44, %c0_18, %c0_19] : memref<5x8x128xf32, #tpu.memory_space<vmem>>, vector<1x8x128xf32>
    %46 = vector.shape_cast %45 : vector<1x8x128xf32> to vector<8x128xf32>
    %47 = arith.cmpf ogt, %43, %46 : vector<8x128xf32>
    %48 = arith.extui %47 : vector<8x128xi1> to vector<8x128xi32>
    %49 = arith.sitofp %48 : vector<8x128xi32> to vector<8x128xf32>
    %50 = arith.truncf %49 : vector<8x128xf32> to vector<8x128xbf16>
    %cst_20 = arith.constant dense<0.000000e+00> : vector<8x256xf32>
    %51 = tpu.matmul %50, %1, %cst_20 {dimension_numbers = #tpu.dot_dimension_numbers<[1], [0], [0], [1], [0, 0, 1, 1], [], []>} : vector<8x128xbf16>, vector<128x256xbf16>, vector<8x256xf32> -> vector<8x256xf32>
    %52 = vector.broadcast %3 : vector<1x256xf32> to vector<8x256xf32>
    %53 = arith.addf %51, %52 : vector<8x256xf32>
    %54 = arith.negf %53 : vector<8x256xf32>
    %55 = math.exp %54 : vector<8x256xf32>
    %cst_21 = arith.constant 1.000000e+00 : f32
    %56 = vector.broadcast %cst_21 : f32 to vector<8x256xf32>
    %57 = arith.addf %56, %55 : vector<8x256xf32>
    %58 = arith.divf %56, %57 : vector<8x256xf32>
    %59 = arith.index_cast %c1_i32 : i32 to index
    %c0_22 = arith.constant 0 : index
    %c0_23 = arith.constant 0 : index
    %60 = vector.load %arg7[%59, %c0_22, %c0_23] : memref<5x8x256xf32, #tpu.memory_space<vmem>>, vector<1x8x256xf32>
    %61 = vector.shape_cast %60 : vector<1x8x256xf32> to vector<8x256xf32>
    %62 = arith.cmpf ogt, %58, %61 : vector<8x256xf32>
    %63 = arith.extui %62 : vector<8x256xi1> to vector<8x256xi32>
    %64 = arith.sitofp %63 : vector<8x256xi32> to vector<8x256xf32>
    %65 = arith.truncf %64 : vector<8x256xf32> to vector<8x256xbf16>
    %c2_i32 = arith.constant 2 : i32
    %cst_24 = arith.constant dense<0.000000e+00> : vector<8x128xf32>
    %66 = tpu.matmul %65, %0, %cst_24 {dimension_numbers = #tpu.dot_dimension_numbers<[1], [0], [0], [1], [0, 0, 1, 1], [], []>} : vector<8x256xbf16>, vector<256x128xbf16>, vector<8x128xf32> -> vector<8x128xf32>
    %67 = vector.broadcast %2 : vector<1x128xf32> to vector<8x128xf32>
    %68 = arith.addf %66, %67 : vector<8x128xf32>
    %69 = arith.negf %68 : vector<8x128xf32>
    %70 = math.exp %69 : vector<8x128xf32>
    %cst_25 = arith.constant 1.000000e+00 : f32
    %71 = vector.broadcast %cst_25 : f32 to vector<8x128xf32>
    %72 = arith.addf %71, %70 : vector<8x128xf32>
    %73 = arith.divf %71, %72 : vector<8x128xf32>
    %74 = arith.index_cast %c2_i32 : i32 to index
    %c0_26 = arith.constant 0 : index
    %c0_27 = arith.constant 0 : index
    %75 = vector.load %arg6[%74, %c0_26, %c0_27] : memref<5x8x128xf32, #tpu.memory_space<vmem>>, vector<1x8x128xf32>
    %76 = vector.shape_cast %75 : vector<1x8x128xf32> to vector<8x128xf32>
    %77 = arith.cmpf ogt, %73, %76 : vector<8x128xf32>
    %78 = arith.extui %77 : vector<8x128xi1> to vector<8x128xi32>
    %79 = arith.sitofp %78 : vector<8x128xi32> to vector<8x128xf32>
    %80 = arith.truncf %79 : vector<8x128xf32> to vector<8x128xbf16>
    %cst_28 = arith.constant dense<0.000000e+00> : vector<8x256xf32>
    %81 = tpu.matmul %80, %1, %cst_28 {dimension_numbers = #tpu.dot_dimension_numbers<[1], [0], [0], [1], [0, 0, 1, 1], [], []>} : vector<8x128xbf16>, vector<128x256xbf16>, vector<8x256xf32> -> vector<8x256xf32>
    %82 = vector.broadcast %3 : vector<1x256xf32> to vector<8x256xf32>
    %83 = arith.addf %81, %82 : vector<8x256xf32>
    %84 = arith.negf %83 : vector<8x256xf32>
    %85 = math.exp %84 : vector<8x256xf32>
    %cst_29 = arith.constant 1.000000e+00 : f32
    %86 = vector.broadcast %cst_29 : f32 to vector<8x256xf32>
    %87 = arith.addf %86, %85 : vector<8x256xf32>
    %88 = arith.divf %86, %87 : vector<8x256xf32>
    %89 = arith.index_cast %c2_i32 : i32 to index
    %c0_30 = arith.constant 0 : index
    %c0_31 = arith.constant 0 : index
    %90 = vector.load %arg7[%89, %c0_30, %c0_31] : memref<5x8x256xf32, #tpu.memory_space<vmem>>, vector<1x8x256xf32>
    %91 = vector.shape_cast %90 : vector<1x8x256xf32> to vector<8x256xf32>
    %92 = arith.cmpf ogt, %88, %91 : vector<8x256xf32>
    %93 = arith.extui %92 : vector<8x256xi1> to vector<8x256xi32>
    %94 = arith.sitofp %93 : vector<8x256xi32> to vector<8x256xf32>
    %95 = arith.truncf %94 : vector<8x256xf32> to vector<8x256xbf16>
    %c3_i32 = arith.constant 3 : i32
    %cst_32 = arith.constant dense<0.000000e+00> : vector<8x128xf32>
    %96 = tpu.matmul %95, %0, %cst_32 {dimension_numbers = #tpu.dot_dimension_numbers<[1], [0], [0], [1], [0, 0, 1, 1], [], []>} : vector<8x256xbf16>, vector<256x128xbf16>, vector<8x128xf32> -> vector<8x128xf32>
    %97 = vector.broadcast %2 : vector<1x128xf32> to vector<8x128xf32>
    %98 = arith.addf %96, %97 : vector<8x128xf32>
    %99 = arith.negf %98 : vector<8x128xf32>
    %100 = math.exp %99 : vector<8x128xf32>
    %cst_33 = arith.constant 1.000000e+00 : f32
    %101 = vector.broadcast %cst_33 : f32 to vector<8x128xf32>
    %102 = arith.addf %101, %100 : vector<8x128xf32>
    %103 = arith.divf %101, %102 : vector<8x128xf32>
    %104 = arith.index_cast %c3_i32 : i32 to index
    %c0_34 = arith.constant 0 : index
    %c0_35 = arith.constant 0 : index
    %105 = vector.load %arg6[%104, %c0_34, %c0_35] : memref<5x8x128xf32, #tpu.memory_space<vmem>>, vector<1x8x128xf32>
    %106 = vector.shape_cast %105 : vector<1x8x128xf32> to vector<8x128xf32>
    %107 = arith.cmpf ogt, %103, %106 : vector<8x128xf32>
    %108 = arith.extui %107 : vector<8x128xi1> to vector<8x128xi32>
    %109 = arith.sitofp %108 : vector<8x128xi32> to vector<8x128xf32>
    %110 = arith.truncf %109 : vector<8x128xf32> to vector<8x128xbf16>
    %cst_36 = arith.constant dense<0.000000e+00> : vector<8x256xf32>
    %111 = tpu.matmul %110, %1, %cst_36 {dimension_numbers = #tpu.dot_dimension_numbers<[1], [0], [0], [1], [0, 0, 1, 1], [], []>} : vector<8x128xbf16>, vector<128x256xbf16>, vector<8x256xf32> -> vector<8x256xf32>
    %112 = vector.broadcast %3 : vector<1x256xf32> to vector<8x256xf32>
    %113 = arith.addf %111, %112 : vector<8x256xf32>
    %114 = arith.negf %113 : vector<8x256xf32>
    %115 = math.exp %114 : vector<8x256xf32>
    %cst_37 = arith.constant 1.000000e+00 : f32
    %116 = vector.broadcast %cst_37 : f32 to vector<8x256xf32>
    %117 = arith.addf %116, %115 : vector<8x256xf32>
    %118 = arith.divf %116, %117 : vector<8x256xf32>
    %119 = arith.index_cast %c3_i32 : i32 to index
    %c0_38 = arith.constant 0 : index
    %c0_39 = arith.constant 0 : index
    %120 = vector.load %arg7[%119, %c0_38, %c0_39] : memref<5x8x256xf32, #tpu.memory_space<vmem>>, vector<1x8x256xf32>
    %121 = vector.shape_cast %120 : vector<1x8x256xf32> to vector<8x256xf32>
    %122 = arith.cmpf ogt, %118, %121 : vector<8x256xf32>
    %123 = arith.extui %122 : vector<8x256xi1> to vector<8x256xi32>
    %124 = arith.sitofp %123 : vector<8x256xi32> to vector<8x256xf32>
    %125 = arith.truncf %124 : vector<8x256xf32> to vector<8x256xbf16>
    %c4_i32 = arith.constant 4 : i32
    %cst_40 = arith.constant dense<0.000000e+00> : vector<8x128xf32>
    %126 = tpu.matmul %125, %0, %cst_40 {dimension_numbers = #tpu.dot_dimension_numbers<[1], [0], [0], [1], [0, 0, 1, 1], [], []>} : vector<8x256xbf16>, vector<256x128xbf16>, vector<8x128xf32> -> vector<8x128xf32>
    %127 = vector.broadcast %2 : vector<1x128xf32> to vector<8x128xf32>
    %128 = arith.addf %126, %127 : vector<8x128xf32>
    %129 = arith.negf %128 : vector<8x128xf32>
    %130 = math.exp %129 : vector<8x128xf32>
    %cst_41 = arith.constant 1.000000e+00 : f32
    %131 = vector.broadcast %cst_41 : f32 to vector<8x128xf32>
    %132 = arith.addf %131, %130 : vector<8x128xf32>
    %133 = arith.divf %131, %132 : vector<8x128xf32>
    %134 = arith.index_cast %c4_i32 : i32 to index
    %c0_42 = arith.constant 0 : index
    %c0_43 = arith.constant 0 : index
    %135 = vector.load %arg6[%134, %c0_42, %c0_43] : memref<5x8x128xf32, #tpu.memory_space<vmem>>, vector<1x8x128xf32>
    %136 = vector.shape_cast %135 : vector<1x8x128xf32> to vector<8x128xf32>
    %137 = arith.cmpf ogt, %133, %136 : vector<8x128xf32>
    %138 = arith.extui %137 : vector<8x128xi1> to vector<8x128xi32>
    %139 = arith.sitofp %138 : vector<8x128xi32> to vector<8x128xf32>
    %140 = arith.truncf %139 : vector<8x128xf32> to vector<8x128xbf16>
    %cst_44 = arith.constant dense<0.000000e+00> : vector<8x256xf32>
    %141 = tpu.matmul %140, %1, %cst_44 {dimension_numbers = #tpu.dot_dimension_numbers<[1], [0], [0], [1], [0, 0, 1, 1], [], []>} : vector<8x128xbf16>, vector<128x256xbf16>, vector<8x256xf32> -> vector<8x256xf32>
    %142 = vector.broadcast %3 : vector<1x256xf32> to vector<8x256xf32>
    %143 = arith.addf %141, %142 : vector<8x256xf32>
    %144 = arith.negf %143 : vector<8x256xf32>
    %145 = math.exp %144 : vector<8x256xf32>
    %cst_45 = arith.constant 1.000000e+00 : f32
    %146 = vector.broadcast %cst_45 : f32 to vector<8x256xf32>
    %147 = arith.addf %146, %145 : vector<8x256xf32>
    %148 = arith.divf %146, %147 : vector<8x256xf32>
    %149 = arith.index_cast %c4_i32 : i32 to index
    %c0_46 = arith.constant 0 : index
    %c0_47 = arith.constant 0 : index
    %150 = vector.load %arg7[%149, %c0_46, %c0_47] : memref<5x8x256xf32, #tpu.memory_space<vmem>>, vector<1x8x256xf32>
    %151 = vector.shape_cast %150 : vector<1x8x256xf32> to vector<8x256xf32>
    %152 = arith.cmpf ogt, %148, %151 : vector<8x256xf32>
    %153 = arith.extui %152 : vector<8x256xi1> to vector<8x256xi32>
    %154 = arith.sitofp %153 : vector<8x256xi32> to vector<8x256xf32>
    %155 = arith.truncf %154 : vector<8x256xf32> to vector<8x256xbf16>
    %c5_i32 = arith.constant 5 : i32
    %156 = arith.extf %155 : vector<8x256xbf16> to vector<8x256xf32>
    %c0_48 = arith.constant 0 : index
    %c0_49 = arith.constant 0 : index
    %157 = vector.load %arg8[%c0_48, %c0_49] : memref<8x256xf32, #tpu.memory_space<vmem>>, vector<8x256xf32>
    tpu.vector_store %arg8[%c0_48, %c0_49], %156 {strides = array<i32>} : memref<8x256xf32, #tpu.memory_space<vmem>>, vector<8x256xf32>,
    return
  }
  func.func @transform_0(%arg0: i32) -> (i32, i32) {
    %c0_i32 = arith.constant 0 : i32
    %c0_i32_0 = arith.constant 0 : i32
    return %arg0, %c0_i32 : i32, i32
  }
  func.func @transform_1(%arg0: i32) -> (i32, i32) {
    %c0_i32 = arith.constant 0 : i32
    %c0_i32_0 = arith.constant 0 : i32
    %c0_i32_1 = arith.constant 0 : i32
    return %c0_i32, %c0_i32_0 : i32, i32
  }
  func.func @transform_2(%arg0: i32) -> (i32, i32) {
    %c0_i32 = arith.constant 0 : i32
    %c0_i32_0 = arith.constant 0 : i32
    %c0_i32_1 = arith.constant 0 : i32
    return %c0_i32, %c0_i32_0 : i32, i32
  }
  func.func @transform_3(%arg0: i32) -> (i32, i32) {
    %c0_i32 = arith.constant 0 : i32
    %c0_i32_0 = arith.constant 0 : i32
    %c0_i32_1 = arith.constant 0 : i32
    return %c0_i32, %c0_i32_0 : i32, i32
  }
  func.func @transform_4(%arg0: i32) -> (i32, i32) {
    %c0_i32 = arith.constant 0 : i32
    %c0_i32_0 = arith.constant 0 : i32
    %c0_i32_1 = arith.constant 0 : i32
    return %c0_i32, %c0_i32_0 : i32, i32
  }
  func.func @transform_5(%arg0: i32) -> (i32, i32, i32) {
    %c0_i32 = arith.constant 0 : i32
    %c0_i32_0 = arith.constant 0 : i32
    %c0_i32_1 = arith.constant 0 : i32
    return %c0_i32, %arg0, %c0_i32_0 : i32, i32, i32
  }
  func.func @transform_6(%arg0: i32) -> (i32, i32, i32) {
    %c0_i32 = arith.constant 0 : i32
    %c0_i32_0 = arith.constant 0 : i32
    %c0_i32_1 = arith.constant 0 : i32
    return %c0_i32, %arg0, %c0_i32_0 : i32, i32, i32
  }
  func.func @transform_7(%arg0: i32) -> (i32, i32) {
    %c0_i32 = arith.constant 0 : i32
    %c0_i32_0 = arith.constant 0 : i32
    return %arg0, %c0_i32 : i32, i32
  }
}

</mosaic_0001>

<llo_original>
// kernel: tpu_custom_call.1
$region0: #{tpu_custom_call.1}
  #allocation0 [shape = 'u32[]', space=smem, size = 0x4, offset = 0x4, fixed_abs, tag = 'smem constant byte address 0x4 - core index']
  #allocation1 [shape = 'u32[144,128]{1,0:T(1,128)}', space=vmem, size = 0x12000, scoped, tag = 'internal scratch']
  %s0 = inlined_call_operand.hbm [shape: f32[16,256], index: 0, kind: input, shape index: {}]
  %s1 = inlined_call_operand.hbm [shape: bf16[256,128], index: 1, kind: input, shape index: {}]
  %s2 = inlined_call_operand.hbm [shape: bf16[128,256], index: 2, kind: input, shape index: {}]
  %s3 = inlined_call_operand.vmem [shape: f32[1,128], index: 3, kind: input, shape index: {}]
  %s4 = inlined_call_operand.vmem [shape: f32[1,256], index: 4, kind: input, shape index: {}]
  %s5 = inlined_call_operand.hbm [shape: f32[5,16,128], index: 5, kind: input, shape index: {}]
  %s6 = inlined_call_operand.hbm [shape: f32[5,16,256], index: 6, kind: input, shape index: {}]
  %s7 = inlined_call_operand.hbm [shape: f32[16,256], index: 7, kind: output, shape index: {}]
  %s8 = sld [smem:[#allocation0]]
  $region81: #{tpu_custom_call.1} parent=0
    _
  %s10 = ssub.s32 1, %s8
  %s11 = scalar_select 0, %s10, %s8
  $region1: #{tpu_custom_call.1} parent=0
    #allocation2 [shape = 'u8[16384]{0}', space=vmem, size = 0x4000, scoped, tag = 'input window, operand 0']
    #allocation3 [shape = 's32[2]{0}', space=sflag, size = 0x8, scoped, tag = 'scoped memory for tpu_custom_call.1']
    #allocation4 [shape = 's32[2]{0}', space=sflag, size = 0x8, scoped, tag = 'scoped memory for tpu_custom_call.1']
    #allocation5 [shape = 'u8[65536]{0}', space=vmem, size = 0x10000, scoped, tag = 'input window, operand 1, single buffered']
    #allocation6 [shape = 's32[1]{0}', space=sflag, size = 0x4, scoped, tag = 'scoped memory for tpu_custom_call.1']
    #allocation7 [shape = 'u8[65536]{0}', space=vmem, size = 0x10000, scoped, tag = 'input window, operand 2, single buffered']
    #allocation8 [shape = 'u8[40960]{0}', space=vmem, size = 0xa000, scoped, tag = 'input window, operand 5']
    #allocation9 [shape = 's32[2]{0}', space=sflag, size = 0x8, scoped, tag = 'scoped memory for tpu_custom_call.1']
    #allocation10 [shape = 'u8[81920]{0}', space=vmem, size = 0x14000, scoped, tag = 'input window, operand 6']
    #allocation11 [shape = 'u8[16384]{0}', space=vmem, size = 0x4000, scoped, tag = 'output window, operand 0']
    %12 = vsyncpa [#allocation3], 0
    %s13 = scalar_lea.sflag [#allocation3], 1
    %14 = vsyncpa %s13, 0
    %15 = vsyncpa [#allocation6], 0
    %16 = vsyncpa [#allocation9], 0
    %s17 = scalar_lea.sflag [#allocation9], 1
    %18 = vsyncpa %s17, 0
    %19 = vsyncpa [#allocation4], 0
    %s20 = scalar_lea.sflag [#allocation4], 1
    %21 = vsyncpa %s20, 0
    loop: start=0, step=1, limit=4
    $region2: #{tpu_custom_call.1} parent=1 // loop_pre_header
      _
    $region3: #{tpu_custom_call.1} parent=1 // loop_header
      %s23 = sphi 0, %s27
      %p24 = scmp.ge.s32.totalorder %s23, 4
      %s33 = sphi 0, %s35
      %s36 = sphi 0, %s33
      %s37 = sphi 0, %s36
      %s53 = sphi 0, %s37
      %s57 = sphi 0, %s57
      %s59 = sphi 0, %s57
      %s60 = sphi 0, %s59
      %s74 = sphi 0, %s60
      %s78 = sphi 0, %s78
      %s80 = sphi 0, %s78
      %s81 = sphi 0, %s80
      %s95 = sphi 0, %s81
      %s99 = sphi 0, %s99
      %s101 = sphi 0, %s99
      %s102 = sphi 0, %s101
      %s116 = sphi 0, %s102
      %s120 = sphi 0, %s120
      %s122 = sphi 0, %s120
      %s123 = sphi 0, %s122
      %s137 = sphi 0, %s123
      %s143 = sphi 0, %s145
      %s146 = sphi 0, %s143
      %s147 = sphi 0, %s146
      %s163 = sphi 0, %s147
      %s169 = sphi 0, %s171
      %s172 = sphi 0, %s169
      %s173 = sphi 0, %s172
      %s189 = sphi 0, %s173
      %s195 = sphi 0, %s197
      %s198 = sphi 0, %s195
      %s199 = sphi 0, %s198
      %s215 = sphi 0, %s199
    $region4: #{tpu_custom_call.1} parent=1 // loop_header_branch
      %26 = sbr.rel (%p24) target = $region8
    $region5: #{tpu_custom_call.1} parent=1 // loop_body
      %s28 = ssub.s32 %s23, 1
      %s29 = ssub.s32 %s23, 2
      %s30 = sadd.s32 %s23, 1
      %s31 = ssub.s32 %s23, %s30
      %p32 = scmp.eq.s32.totalorder %s31, 0
      %s34 = sadd.s32 %s33, 1
      %s35 = scalar_select %p32, %s33, %s34
      %p38 = pneg %p32
      %p39 = scmp.eq.s32.totalorder %s23, 1
      %p40 = por %p38, %p39
      %p41 = scmp.ne.s32.totalorder %s33, %s36
      %p42 = scmp.eq.s32.totalorder %s23, 0
      %p43 = por %p41, %p42
      %p44 = scmp.ne.s32.totalorder %s33, %s36
      %p45 = scmp.eq.s32.totalorder %s28, 1
      %p46 = por %p44, %p45
      %p47 = scmp.ne.s32.totalorder %s36, %s37
      %p48 = scmp.eq.s32.totalorder %s28, 0
      %p49 = por %p47, %p48
      %p50 = scmp.ne.s32.totalorder %s36, %s37
      %p51 = scmp.eq.s32.totalorder %s29, 1
      %p52 = por %p50, %p51
      %p54 = scmp.ne.s32.totalorder %s37, %s53
      %p55 = scmp.eq.s32.totalorder %s29, 0
      %p56 = por %p54, %p55
      %s58 = sadd.s32 %s57, 1
      %p61 = scmp.eq.s32.totalorder %s23, 1
      %p62 = scmp.ne.s32.totalorder %s57, %s59
      %p63 = scmp.eq.s32.totalorder %s23, 0
      %p64 = por %p62, %p63
      %p65 = scmp.ne.s32.totalorder %s57, %s59
      %p66 = scmp.eq.s32.totalorder %s28, 1
      %p67 = por %p65, %p66
      %p68 = scmp.ne.s32.totalorder %s59, %s60
      %p69 = scmp.eq.s32.totalorder %s28, 0
      %p70 = por %p68, %p69
      %p71 = scmp.ne.s32.totalorder %s59, %s60
      %p72 = scmp.eq.s32.totalorder %s29, 1
      %p73 = por %p71, %p72
      %p75 = scmp.ne.s32.totalorder %s60, %s74
      %p76 = scmp.eq.s32.totalorder %s29, 0
      %p77 = por %p75, %p76
      %s79 = sadd.s32 %s78, 1
      %p82 = scmp.eq.s32.totalorder %s23, 1
      %p83 = scmp.ne.s32.totalorder %s78, %s80
      %p84 = scmp.eq.s32.totalorder %s23, 0
      %p85 = por %p83, %p84
      %p86 = scmp.ne.s32.totalorder %s78, %s80
      %p87 = scmp.eq.s32.totalorder %s28, 1
      %p88 = por %p86, %p87
      %p89 = scmp.ne.s32.totalorder %s80, %s81
      %p90 = scmp.eq.s32.totalorder %s28, 0
      %p91 = por %p89, %p90
      %p92 = scmp.ne.s32.totalorder %s80, %s81
      %p93 = scmp.eq.s32.totalorder %s29, 1
      %p94 = por %p92, %p93
      %p96 = scmp.ne.s32.totalorder %s81, %s95
      %p97 = scmp.eq.s32.totalorder %s29, 0
      %p98 = por %p96, %p97
      %s100 = sadd.s32 %s99, 1
      %p103 = scmp.eq.s32.totalorder %s23, 1
      %p104 = scmp.ne.s32.totalorder %s99, %s101
      %p105 = scmp.eq.s32.totalorder %s23, 0
      %p106 = por %p104, %p105
      %p107 = scmp.ne.s32.totalorder %s99, %s101
      %p108 = scmp.eq.s32.totalorder %s28, 1
      %p109 = por %p107, %p108
      %p110 = scmp.ne.s32.totalorder %s101, %s102
      %p111 = scmp.eq.s32.totalorder %s28, 0
      %p112 = por %p110, %p111
      %p113 = scmp.ne.s32.totalorder %s101, %s102
      %p114 = scmp.eq.s32.totalorder %s29, 1
      %p115 = por %p113, %p114
      %p117 = scmp.ne.s32.totalorder %s102, %s116
      %p118 = scmp.eq.s32.totalorder %s29, 0
      %p119 = por %p117, %p118
      %s121 = sadd.s32 %s120, 1
      %p124 = scmp.eq.s32.totalorder %s23, 1
      %p125 = scmp.ne.s32.totalorder %s120, %s122
      %p126 = scmp.eq.s32.totalorder %s23, 0
      %p127 = por %p125, %p126
      %p128 = scmp.ne.s32.totalorder %s120, %s122
      %p129 = scmp.eq.s32.totalorder %s28, 1
      %p130 = por %p128, %p129
      %p131 = scmp.ne.s32.totalorder %s122, %s123
      %p132 = scmp.eq.s32.totalorder %s28, 0
      %p133 = por %p131, %p132
      %p134 = scmp.ne.s32.totalorder %s122, %s123
      %p135 = scmp.eq.s32.totalorder %s29, 1
      %p136 = por %p134, %p135
      %p138 = scmp.ne.s32.totalorder %s123, %s137
      %p139 = scmp.eq.s32.totalorder %s29, 0
      %p140 = por %p138, %p139
      %s141 = ssub.s32 %s23, %s30
      %p142 = scmp.eq.s32.totalorder %s141, 0
      %s144 = sadd.s32 %s143, 1
      %s145 = scalar_select %p142, %s143, %s144
      %p148 = pneg %p142
      %p149 = scmp.eq.s32.totalorder %s23, 1
      %p150 = por %p148, %p149
      %p151 = scmp.ne.s32.totalorder %s143, %s146
      %p152 = scmp.eq.s32.totalorder %s23, 0
      %p153 = por %p151, %p152
      %p154 = scmp.ne.s32.totalorder %s143, %s146
      %p155 = scmp.eq.s32.totalorder %s28, 1
      %p156 = por %p154, %p155
      %p157 = scmp.ne.s32.totalorder %s146, %s147
      %p158 = scmp.eq.s32.totalorder %s28, 0
      %p159 = por %p157, %p158
      %p160 = scmp.ne.s32.totalorder %s146, %s147
      %p161 = scmp.eq.s32.totalorder %s29, 1
      %p162 = por %p160, %p161
      %p164 = scmp.ne.s32.totalorder %s147, %s163
      %p165 = scmp.eq.s32.totalorder %s29, 0
      %p166 = por %p164, %p165
      %s167 = ssub.s32 %s23, %s30
      %p168 = scmp.eq.s32.totalorder %s167, 0
      %s170 = sadd.s32 %s169, 1
      %s171 = scalar_select %p168, %s169, %s170
      %p174 = pneg %p168
      %p175 = scmp.eq.s32.totalorder %s23, 1
      %p176 = por %p174, %p175
      %p177 = scmp.ne.s32.totalorder %s169, %s172
      %p178 = scmp.eq.s32.totalorder %s23, 0
      %p179 = por %p177, %p178
      %p180 = scmp.ne.s32.totalorder %s169, %s172
      %p181 = scmp.eq.s32.totalorder %s28, 1
      %p182 = por %p180, %p181
      %p183 = scmp.ne.s32.totalorder %s172, %s173
      %p184 = scmp.eq.s32.totalorder %s28, 0
      %p185 = por %p183, %p184
      %p186 = scmp.ne.s32.totalorder %s172, %s173
      %p187 = scmp.eq.s32.totalorder %s29, 1
      %p188 = por %p186, %p187
      %p190 = scmp.ne.s32.totalorder %s173, %s189
      %p191 = scmp.eq.s32.totalorder %s29, 0
      %p192 = por %p190, %p191
      %s193 = ssub.s32 %s23, %s30
      %p194 = scmp.eq.s32.totalorder %s193, 0
      %s196 = sadd.s32 %s195, 1
      %s197 = scalar_select %p194, %s195, %s196
      %p200 = pneg %p194
      %p201 = scmp.eq.s32.totalorder %s23, 1
      %p202 = por %p200, %p201
      %p203 = scmp.ne.s32.totalorder %s195, %s198
      %p204 = scmp.eq.s32.totalorder %s23, 0
      %p205 = por %p203, %p204
      %p206 = scmp.ne.s32.totalorder %s195, %s198
      %p207 = scmp.eq.s32.totalorder %s28, 1
      %p208 = por %p206, %p207
      %p209 = scmp.ne.s32.totalorder %s198, %s199
      %p210 = scmp.eq.s32.totalorder %s28, 0
      %p211 = por %p209, %p210
      %p212 = scmp.ne.s32.totalorder %s198, %s199
      %p213 = scmp.eq.s32.totalorder %s29, 1
      %p214 = por %p212, %p213
      %p216 = scmp.ne.s32.totalorder %s199, %s215
      %p217 = scmp.eq.s32.totalorder %s29, 0
      %p218 = por %p216, %p217
      %p219 = scmp.le.s32.totalorder 1, %s23
      %p220 = scmp.lt.s32.totalorder %s23, 3
      %p221 = pnand %p219, %p220
      %p222 = pneg %p221
      // Predicated region
      $region9: #{tpu_custom_call.1} parent=5 // pred_check
        _
      $region10: #{tpu_custom_call.1} parent=5 // pred_check_branch
        %224 = sbr.rel (%p221) target = $region12
      $region11: #{tpu_custom_call.1} parent=5 // pred_region
        %s225 = ssub.s32 %s23, 1
        // Predicated region
        $region13: #{tpu_custom_call.1} parent=11 // pred_check
          %p226 = pneg %p70
        $region14: #{tpu_custom_call.1} parent=11 // pred_check_branch
          %228 = sbr.rel (%p226) target = $region16
        $region15: #{tpu_custom_call.1} parent=11 // pred_region
          %s230 = ssub.s32 2048, 2048
          %231 = vsyncadd [#allocation6], %s230
          %s232 = sshll.u32 [#allocation5], 4
          %s233 = int_to_ptr.vmem [resolvable:$true] %s232
          %238 = dma.hbm_to_vmem [thread:$0]  %s1, 2048, %s233, [#allocation6], 64, 64, 4
        $region16: #{tpu_custom_call.1} parent=11 // pred_fallthru
          _
        // Predicated region
        $region17: #{tpu_custom_call.1} parent=11 // pred_check
          %p239 = pneg %p91
        $region18: #{tpu_custom_call.1} parent=11 // pred_check_branch
          %241 = sbr.rel (%p239) target = $region20
        $region19: #{tpu_custom_call.1} parent=11 // pred_region
          %s243 = ssub.s32 2048, 2048
          %244 = vsyncadd [#allocation6], %s243
          %s245 = sshll.u32 [#allocation7], 4
          %s246 = int_to_ptr.vmem [resolvable:$true] %s245
          %251 = dma.hbm_to_vmem [thread:$0]  %s2, 2048, %s246, [#allocation6], 128, 128, 8
        $region20: #{tpu_custom_call.1} parent=11 // pred_fallthru
          _
        // Predicated region
        $region21: #{tpu_custom_call.1} parent=11 // pred_check
          %p252 = pneg %p112
        $region22: #{tpu_custom_call.1} parent=11 // pred_check_branch
          %254 = sbr.rel (%p252) target = $region24
        $region23: #{tpu_custom_call.1} parent=11 // pred_region
          _
        $region24: #{tpu_custom_call.1} parent=11 // pred_fallthru
          _
        // Predicated region
        $region25: #{tpu_custom_call.1} parent=11 // pred_check
          %p255 = pneg %p133
        $region26: #{tpu_custom_call.1} parent=11 // pred_check_branch
          %257 = sbr.rel (%p255) target = $region28
        $region27: #{tpu_custom_call.1} parent=11 // pred_region
          _
        $region28: #{tpu_custom_call.1} parent=11 // pred_fallthru
          _
      $region12: #{tpu_custom_call.1} parent=5 // pred_fallthru
        _
      %p258 = scmp.lt.s32.totalorder %s23, 2
      // Predicated region
      $region29: #{tpu_custom_call.1} parent=5 // pred_check
        %p259 = pneg %p258
      $region30: #{tpu_custom_call.1} parent=5 // pred_check_branch
        %261 = sbr.rel (%p259) target = $region32
      $region31: #{tpu_custom_call.1} parent=5 // pred_region
        // Predicated region
        $region33: #{tpu_custom_call.1} parent=31 // pred_check
          %p262 = pneg %p43
        $region34: #{tpu_custom_call.1} parent=31 // pred_check_branch
          %264 = sbr.rel (%p262) target = $region36
        $region35: #{tpu_custom_call.1} parent=31 // pred_region
          %s265 = sand.u32 %s33, 1
          %s266 = scalar_lea.sflag [#allocation3], %s265
          %s267 = sand.u32 %s33, 1
          %s268 = smul.addr %s267, 16
          %s269 = scalar_lea.vmem [#allocation2], %s268
          %s271 = ssub.s32 256, 256
          %272 = vsyncadd %s266, %s271
          %s273 = smul.addr %s23, 2
          %s274 = smul.addr %s273, 128
          %s275 = scalar_lea.hbm %s0, %s274
          %s277 = sshll.u32 %s269, 4
          %s278 = int_to_ptr.vmem [resolvable:$true] %s277
          %280 = dma.hbm_to_vmem [thread:$0]  %s275, 256, %s278, %s266
        $region36: #{tpu_custom_call.1} parent=31 // pred_fallthru
          _
        // Predicated region
        $region37: #{tpu_custom_call.1} parent=31 // pred_check
          %p281 = pneg %p153
        $region38: #{tpu_custom_call.1} parent=31 // pred_check_branch
          %283 = sbr.rel (%p281) target = $region40
        $region39: #{tpu_custom_call.1} parent=31 // pred_region
          %s284 = sand.u32 %s23, 1
          %s285 = scalar_lea.sflag [#allocation9], %s284
          %s286 = sand.u32 %s143, 1
          %s287 = smul.addr %s286, 40
          %s288 = scalar_lea.vmem [#allocation8], %s287
          %s290 = ssub.s32 640, 640
          %291 = vsyncadd %s285, %s290
          %s292 = smul.addr %s23, 128
          %s293 = scalar_lea.hbm %s5, %s292
          %s294 = sshll.u32 %s288, 4
          %s295 = int_to_ptr.vmem [resolvable:$true] %s294
          %300 = dma.hbm_to_vmem [thread:$0]  %s293, 640, %s295, %s285, 256, 128, 8
        $region40: #{tpu_custom_call.1} parent=31 // pred_fallthru
          _
        // Predicated region
        $region41: #{tpu_custom_call.1} parent=31 // pred_check
          %p301 = pneg %p179
        $region42: #{tpu_custom_call.1} parent=31 // pred_check_branch
          %303 = sbr.rel (%p301) target = $region44
        $region43: #{tpu_custom_call.1} parent=31 // pred_region
          %s304 = sand.u32 %s23, 1
          %s305 = scalar_lea.sflag [#allocation9], %s304
          %s306 = sand.u32 %s169, 1
          %s307 = smul.addr %s306, 80
          %s308 = scalar_lea.vmem [#allocation10], %s307
          %s310 = ssub.s32 1280, 1280
          %311 = vsyncadd %s305, %s310
          %s312 = smul.addr %s23, 2
          %s313 = smul.addr %s312, 128
          %s314 = scalar_lea.hbm %s6, %s313
          %s315 = sshll.u32 %s308, 4
          %s316 = int_to_ptr.vmem [resolvable:$true] %s315
          %321 = dma.hbm_to_vmem [thread:$0]  %s314, 1280, %s316, %s305, 512, 256, 16
        $region44: #{tpu_custom_call.1} parent=31 // pred_fallthru
          _
      $region32: #{tpu_custom_call.1} parent=5 // pred_fallthru
        _
      %p322 = scmp.le.s32.totalorder 1, %s23
      %p323 = scmp.lt.s32.totalorder %s23, 3
      %p324 = pnand %p322, %p323
      %p325 = pneg %p324
      // Predicated region
      $region45: #{tpu_custom_call.1} parent=5 // pred_check
        _
      $region46: #{tpu_custom_call.1} parent=5 // pred_check_branch
        %327 = sbr.rel (%p324) target = $region48
      $region47: #{tpu_custom_call.1} parent=5 // pred_region
        %s328 = ssub.s32 %s23, 1
        %s329 = sand.u32 %s36, 1
        %s330 = scalar_lea.sflag [#allocation3], %s329
        %s331 = sand.u32 %s36, 1
        %s332 = smul.addr %s331, 16
        %s333 = scalar_lea.vmem [#allocation2], %s332
        // Predicated region
        $region49: #{tpu_custom_call.1} parent=47 // pred_check
          %p334 = pneg %p49
        $region50: #{tpu_custom_call.1} parent=47 // pred_check_branch
          %336 = sbr.rel (%p334) target = $region52
        $region51: #{tpu_custom_call.1} parent=47 // pred_region
          %337 = dma.done %s330, 256
        $region52: #{tpu_custom_call.1} parent=47 // pred_fallthru
          _
        // Predicated region
        $region53: #{tpu_custom_call.1} parent=47 // pred_check
          %p338 = pneg %p70
        $region54: #{tpu_custom_call.1} parent=47 // pred_check_branch
          %340 = sbr.rel (%p338) target = $region56
        $region55: #{tpu_custom_call.1} parent=47 // pred_region
          %341 = dma.done [#allocation6], 2048
        $region56: #{tpu_custom_call.1} parent=47 // pred_fallthru
          _
        // Predicated region
        $region57: #{tpu_custom_call.1} parent=47 // pred_check
          %p342 = pneg %p91
        $region58: #{tpu_custom_call.1} parent=47 // pred_check_branch
          %344 = sbr.rel (%p342) target = $region60
        $region59: #{tpu_custom_call.1} parent=47 // pred_region
          %345 = dma.done [#allocation6], 2048
        $region60: #{tpu_custom_call.1} parent=47 // pred_fallthru
          _
        %s346 = sand.u32 %s28, 1
        %s347 = scalar_lea.sflag [#allocation9], %s346
        %s348 = sand.u32 %s146, 1
        %s349 = smul.addr %s348, 40
        %s350 = scalar_lea.vmem [#allocation8], %s349
        // Predicated region
        $region61: #{tpu_custom_call.1} parent=47 // pred_check
          %p351 = pneg %p159
        $region62: #{tpu_custom_call.1} parent=47 // pred_check_branch
          %353 = sbr.rel (%p351) target = $region64
        $region63: #{tpu_custom_call.1} parent=47 // pred_region
          %354 = dma.done %s347, 640
        $region64: #{tpu_custom_call.1} parent=47 // pred_fallthru
          _
        %s355 = sand.u32 %s28, 1
        %s356 = scalar_lea.sflag [#allocation9], %s355
        %s357 = sand.u32 %s172, 1
        %s358 = smul.addr %s357, 80
        %s359 = scalar_lea.vmem [#allocation10], %s358
        // Predicated region
        $region65: #{tpu_custom_call.1} parent=47 // pred_check
          %p360 = pneg %p185
        $region66: #{tpu_custom_call.1} parent=47 // pred_check_branch
          %362 = sbr.rel (%p360) target = $region68
        $region67: #{tpu_custom_call.1} parent=47 // pred_region
          %363 = dma.done %s356, 1280
        $region68: #{tpu_custom_call.1} parent=47 // pred_fallthru
          _
        %s364 = sand.u32 %s36, 1
        %s365 = scalar_lea.sflag [#allocation3], %s364
        %s366 = sand.u32 %s36, 1
        %s367 = smul.addr %s366, 16
        %s368 = scalar_lea.vmem [#allocation2], %s367
        %p369 = pneg %p49
        %p370 = pneg %p46
        %p371 = pneg %p70
        %p372 = pneg %p67
        %p373 = pneg %p91
        %p374 = pneg %p88
        %p375 = pneg %p112
        %p376 = pneg %p109
        %p377 = pneg %p133
        %p378 = pneg %p130
        %s379 = sand.u32 %s28, 1
        %s380 = scalar_lea.sflag [#allocation9], %s379
        %s381 = sand.u32 %s146, 1
        %s382 = smul.addr %s381, 40
        %s383 = scalar_lea.vmem [#allocation8], %s382
        %p384 = pneg %p159
        %p385 = pneg %p156
        %s386 = sand.u32 %s28, 1
        %s387 = scalar_lea.sflag [#allocation9], %s386
        %s388 = sand.u32 %s172, 1
        %s389 = smul.addr %s388, 80
        %s390 = scalar_lea.vmem [#allocation10], %s389
        %p391 = pneg %p185
        %p392 = pneg %p182
        %p393 = pneg %p211
        %p394 = pneg %p208
        %s395 = sand.u32 %s198, 1
        %s396 = scalar_lea.sflag [#allocation4], %s395
        %s397 = sand.u32 %s198, 1
        %s398 = smul.addr %s397, 16
        %s399 = scalar_lea.vmem [#allocation11], %s398
        %v401 = vld [vmem:[#allocation5] sm:$0xf]
        %v402 = vld [vmem:[#allocation5 + $0x4] sm:$0xf]
        %v403 = vld [vmem:[#allocation5 + $0x8] sm:$0xf]
        %v404 = vld [vmem:[#allocation5 + $0xc] sm:$0xf]
        %v405 = vld [vmem:[#allocation5 + $0x10] sm:$0xf]
        %v406 = vld [vmem:[#allocation5 + $0x14] sm:$0xf]
        %v407 = vld [vmem:[#allocation5 + $0x18] sm:$0xf]
        %v408 = vld [vmem:[#allocation5 + $0x1c] sm:$0xf]
        %v409 = vld [vmem:[#allocation5 + $0x20] sm:$0xf]
        %v410 = vld [vmem:[#allocation5 + $0x24] sm:$0xf]
        %v411 = vld [vmem:[#allocation5 + $0x28] sm:$0xf]
        %v412 = vld [vmem:[#allocation5 + $0x2c] sm:$0xf]
        %v413 = vld [vmem:[#allocation5 + $0x30] sm:$0xf]
        %v414 = vld [vmem:[#allocation5 + $0x34] sm:$0xf]
        %v415 = vld [vmem:[#allocation5 + $0x38] sm:$0xf]
        %v416 = vld [vmem:[#allocation5 + $0x3c] sm:$0xf]
        %v417 = vld [vmem:[#allocation5 + $0x40] sm:$0xf]
        %v418 = vld [vmem:[#allocation5 + $0x44] sm:$0xf]
        %v419 = vld [vmem:[#allocation5 + $0x48] sm:$0xf]
        %v420 = vld [vmem:[#allocation5 + $0x4c] sm:$0xf]
        %v421 = vld [vmem:[#allocation5 + $0x50] sm:$0xf]
        %v422 = vld [vmem:[#allocation5 + $0x54] sm:$0xf]
        %v423 = vld [vmem:[#allocation5 + $0x58] sm:$0xf]
        %v424 = vld [vmem:[#allocation5 + $0x5c] sm:$0xf]
        %v425 = vld [vmem:[#allocation5 + $0x60] sm:$0xf]
        %v426 = vld [vmem:[#allocation5 + $0x64] sm:$0xf]
        %v427 = vld [vmem:[#allocation5 + $0x68] sm:$0xf]
        %v428 = vld [vmem:[#allocation5 + $0x6c] sm:$0xf]
        %v429 = vld [vmem:[#allocation5 + $0x70] sm:$0xf]
        %v430 = vld [vmem:[#allocation5 + $0x74] sm:$0xf]
        %v431 = vld [vmem:[#allocation5 + $0x78] sm:$0xf]
        %v432 = vld [vmem:[#allocation5 + $0x7c] sm:$0xf]
        %v433 = vld [vmem:[#allocation7] sm:$0xff]
        %v434 = vld [vmem:[#allocation7 + $0x8] sm:$0xff]
        %v435 = vld [vmem:[#allocation7 + $0x10] sm:$0xff]
        %v436 = vld [vmem:[#allocation7 + $0x18] sm:$0xff]
        %v437 = vld [vmem:[#allocation7 + $0x20] sm:$0xff]
        %v438 = vld [vmem:[#allocation7 + $0x28] sm:$0xff]
        %v439 = vld [vmem:[#allocation7 + $0x30] sm:$0xff]
        %v440 = vld [vmem:[#allocation7 + $0x38] sm:$0xff]
        %v441 = vld [vmem:[#allocation7 + $0x40] sm:$0xff]
        %v442 = vld [vmem:[#allocation7 + $0x48] sm:$0xff]
        %v443 = vld [vmem:[#allocation7 + $0x50] sm:$0xff]
        %v444 = vld [vmem:[#allocation7 + $0x58] sm:$0xff]
        %v445 = vld [vmem:[#allocation7 + $0x60] sm:$0xff]
        %v446 = vld [vmem:[#allocation7 + $0x68] sm:$0xff]
        %v447 = vld [vmem:[#allocation7 + $0x70] sm:$0xff]
        %v448 = vld [vmem:[#allocation7 + $0x78] sm:$0xff]
        %v449 = vld [vmem:[%s3] sm:$0x1]
        %v450 = vld [vmem:[%s4] sm:$0x3]
        %v451 = vld [vmem:[%s333] sm:$0xff]
        %v452 = vld [vmem:[%s333 + $0x8] sm:$0xff]
        %v453 = vpack.c.bf16 %v451, %v451
        %v454 = vpack.c.bf16 %v452, %v452
        %v456 = vlaneseq
        %v457 = vshrl.u32 %v456, 7
        %v458 = vsub.s32 0, %v457
        %v459 = vrot.slane %v449, %v458
        %v493 = vunpack.c.l.b16 %v401
        %v494 = vunpack.c.l.b16 %v402
        %v495 = vunpack.c.l.b16 %v403
        %v496 = vunpack.c.l.b16 %v404
        %v497 = vunpack.c.l.b16 %v405
        %v498 = vunpack.c.l.b16 %v406
        %v499 = vunpack.c.l.b16 %v407
        %v500 = vunpack.c.l.b16 %v408
        %v501 = vunpack.c.l.b16 %v409
        %v502 = vunpack.c.l.b16 %v410
        %v503 = vunpack.c.l.b16 %v411
        %v504 = vunpack.c.l.b16 %v412
        %v505 = vunpack.c.l.b16 %v413
        %v506 = vunpack.c.l.b16 %v414
        %v507 = vunpack.c.l.b16 %v415
        %v508 = vunpack.c.l.b16 %v416
        %v509 = vunpack.c.l.b16 %v417
        %v510 = vunpack.c.l.b16 %v418
        %v511 = vunpack.c.l.b16 %v419
        %v512 = vunpack.c.l.b16 %v420
        %v513 = vunpack.c.l.b16 %v421
        %v514 = vunpack.c.l.b16 %v422
        %v515 = vunpack.c.l.b16 %v423
        %v516 = vunpack.c.l.b16 %v424
        %v517 = vunpack.c.l.b16 %v425
        %v518 = vunpack.c.l.b16 %v426
        %v519 = vunpack.c.l.b16 %v427
        %v520 = vunpack.c.l.b16 %v428
        %v521 = vunpack.c.l.b16 %v429
        %v522 = vunpack.c.l.b16 %v430
        %v523 = vunpack.c.l.b16 %v431
        %v524 = vunpack.c.l.b16 %v432
        %v525 = vpack.c.b16 %v494, %v493
        %v526 = vpack.c.b16 %v496, %v495
        %v527 = vpack.c.b16 %v498, %v497
        %v528 = vpack.c.b16 %v500, %v499
        %v529 = vpack.c.b16 %v502, %v501
        %v530 = vpack.c.b16 %v504, %v503
        %v531 = vpack.c.b16 %v506, %v505
        %v532 = vpack.c.b16 %v508, %v507
        %v533 = vpack.c.b16 %v510, %v509
        %v534 = vpack.c.b16 %v512, %v511
        %v535 = vpack.c.b16 %v514, %v513
        %v536 = vpack.c.b16 %v516, %v515
        %v537 = vpack.c.b16 %v518, %v517
        %v538 = vpack.c.b16 %v520, %v519
        %v539 = vpack.c.b16 %v522, %v521
        %v540 = vpack.c.b16 %v524, %v523
        %557 = vmatprep.subr.bf16.mxu0 0
        %558 = vmatpush1.bf16.msra.mxu0 %v525
        %559 = vmatprep.subr.bf16.mxu0 0
        %560 = vmatpush1.bf16.msra.mxu0 %v526
        %561 = vmatprep.subr.bf16.mxu0 0
        %562 = vmatpush1.bf16.msra.mxu0 %v527
        %563 = vmatprep.subr.bf16.mxu0 0
        %564 = vmatpush1.bf16.msra.mxu0 %v528
        %565 = vmatprep.subr.bf16.mxu0 0
        %566 = vmatpush1.bf16.msra.mxu0 %v529
        %567 = vmatprep.subr.bf16.mxu0 0
        %568 = vmatpush1.bf16.msra.mxu0 %v530
        %569 = vmatprep.subr.bf16.mxu0 0
        %570 = vmatpush1.bf16.msra.mxu0 %v531
        %571 = vmatprep.subr.bf16.mxu0 0
        %572 = vmatpush1.bf16.msra.mxu0 %v532
        %573 = vmatprep.subr.bf16.mxu0 0
        %574 = vmatpush1.bf16.msra.mxu0 %v533
        %575 = vmatprep.subr.bf16.mxu0 0
        %576 = vmatpush1.bf16.msra.mxu0 %v534
        %577 = vmatprep.subr.bf16.mxu0 0
        %578 = vmatpush1.bf16.msra.mxu0 %v535
        %579 = vmatprep.subr.bf16.mxu0 0
        %580 = vmatpush1.bf16.msra.mxu0 %v536
        %581 = vmatprep.subr.bf16.mxu0 0
        %582 = vmatpush1.bf16.msra.mxu0 %v537
        %583 = vmatprep.subr.bf16.mxu0 0
        %584 = vmatpush1.bf16.msra.mxu0 %v538
        %585 = vmatprep.subr.bf16.mxu0 0
        %586 = vmatpush1.bf16.msra.mxu0 %v539
        %587 = vmatprep.subr.bf16.mxu0 0
        %588 = vmatpush1.bf16.msra.mxu0 %v540
        %589 = vmatprep.mubr.bf16.mxu0 %v454
        %590 = vmatmul.mubr.bf16.gmra.mrb[0].mxu0 %v453
        %v591 = vpop.f32.mrb[0].mxu0
        %v592 = vadd.f32 %v459, %v591
        %v593 = vpop.f32.mrb[0].mxu0
        %v594 = vpop.f32.mrb[0].mxu0
        %v595 = vpop.f32.mrb[0].mxu0
        %596 = vdwg.mxu0
        %v597 = vxor.u32 %v592, 2147483648
        %v598 = vmul.f32 %v597, 1.442695
        %v599 = vpow.pop %v598
        %v600 = vadd.f32 %v599, 1.0
        %v601 = vrcp.pop %v600
        %v602 = vmul.f32 1.0, %v601
        %v603 = vld [vmem:[%s350] sm:$0xff]
        %vm604 = vcmp.gt.f32.partialorder %v602, %v603
        %v605 = vsel %vm604, 1, 0
        %v606 = vcvt.s32.f32 %v605
        %v607 = vpack.c.bf16 %v606, %v606
        %v609 = vlaneseq
        %v610 = vshrl.u32 %v609, 7
        %v611 = vsub.s32 0, %v610
        %v612 = vrot.slane %v450, %v611
        %v613 = vlaneseq
        %v614 = vshrl.u32 %v613, 7
        %v615 = vsub.s32 1, %v614
        %v616 = vrot.slane %v450, %v615
        %v635 = vunpack.c.l.b16 %v433
        %v636 = vunpack.c.h.b16 %v433
        %v637 = vunpack.c.l.b16 %v434
        %v638 = vunpack.c.h.b16 %v434
        %v639 = vunpack.c.l.b16 %v435
        %v640 = vunpack.c.h.b16 %v435
        %v641 = vunpack.c.l.b16 %v436
        %v642 = vunpack.c.h.b16 %v436
        %v643 = vunpack.c.l.b16 %v437
        %v644 = vunpack.c.h.b16 %v437
        %v645 = vunpack.c.l.b16 %v438
        %v646 = vunpack.c.h.b16 %v438
        %v647 = vunpack.c.l.b16 %v439
        %v648 = vunpack.c.h.b16 %v439
        %v649 = vunpack.c.l.b16 %v440
        %v650 = vunpack.c.h.b16 %v440
        %v651 = vunpack.c.l.b16 %v441
        %v652 = vunpack.c.h.b16 %v441
        %v653 = vunpack.c.l.b16 %v442
        %v654 = vunpack.c.h.b16 %v442
        %v655 = vunpack.c.l.b16 %v443
        %v656 = vunpack.c.h.b16 %v443
        %v657 = vunpack.c.l.b16 %v444
        %v658 = vunpack.c.h.b16 %v444
        %v659 = vunpack.c.l.b16 %v445
        %v660 = vunpack.c.h.b16 %v445
        %v661 = vunpack.c.l.b16 %v446
        %v662 = vunpack.c.h.b16 %v446
        %v663 = vunpack.c.l.b16 %v447
        %v664 = vunpack.c.h.b16 %v447
        %v665 = vunpack.c.l.b16 %v448
        %v666 = vunpack.c.h.b16 %v448
        %v667 = vpack.c.b16 %v637, %v635
        %v668 = vpack.c.b16 %v638, %v636
        %v669 = vpack.c.b16 %v641, %v639
        %v670 = vpack.c.b16 %v642, %v640
        %v671 = vpack.c.b16 %v645, %v643
        %v672 = vpack.c.b16 %v646, %v644
        %v673 = vpack.c.b16 %v649, %v647
        %v674 = vpack.c.b16 %v650, %v648
        %v675 = vpack.c.b16 %v653, %v651
        %v676 = vpack.c.b16 %v654, %v652
        %v677 = vpack.c.b16 %v657, %v655
        %v678 = vpack.c.b16 %v658, %v656
        %v679 = vpack.c.b16 %v661, %v659
        %v680 = vpack.c.b16 %v662, %v660
        %v681 = vpack.c.b16 %v665, %v663
        %v682 = vpack.c.b16 %v666, %v664
        %699 = vmatprep.subr.bf16.mxu0 %v668
        %700 = vmatpush1.bf16.msra.mxu0 %v667
        %701 = vmatprep.subr.bf16.mxu0 %v670
        %702 = vmatpush1.bf16.msra.mxu0 %v669
        %703 = vmatprep.subr.bf16.mxu0 %v672
        %704 = vmatpush1.bf16.msra.mxu0 %v671
        %705 = vmatprep.subr.bf16.mxu0 %v674
        %706 = vmatpush1.bf16.msra.mxu0 %v673
        %707 = vmatprep.subr.bf16.mxu0 %v676
        %708 = vmatpush1.bf16.msra.mxu0 %v675
        %709 = vmatprep.subr.bf16.mxu0 %v678
        %710 = vmatpush1.bf16.msra.mxu0 %v677
        %711 = vmatprep.subr.bf16.mxu0 %v680
        %712 = vmatpush1.bf16.msra.mxu0 %v679
        %713 = vmatprep.subr.bf16.mxu0 %v682
        %714 = vmatpush1.bf16.msra.mxu0 %v681
        %715 = vmatprep.subr.bf16.mxu0 0
        %716 = vmatpush1.bf16.msra.mxu0 0
        %717 = vmatprep.subr.bf16.mxu0 0
        %718 = vmatpush1.bf16.msra.mxu0 0
        %719 = vmatprep.subr.bf16.mxu0 0
        %720 = vmatpush1.bf16.msra.mxu0 0
        %721 = vmatprep.subr.bf16.mxu0 0
        %722 = vmatpush1.bf16.msra.mxu0 0
        %723 = vmatprep.subr.bf16.mxu0 0
        %724 = vmatpush1.bf16.msra.mxu0 0
        %725 = vmatprep.subr.bf16.mxu0 0
        %726 = vmatpush1.bf16.msra.mxu0 0
        %727 = vmatprep.subr.bf16.mxu0 0
        %728 = vmatpush1.bf16.msra.mxu0 0
        %729 = vmatprep.subr.bf16.mxu0 0
        %730 = vmatpush1.bf16.msra.mxu0 0
        %731 = vmatprep.mubr.bf16.mxu0 0
        %732 = vmatmul.mubr.bf16.gmra.mrb[0].mxu0 %v607
        %v733 = vpop.f32.mrb[0].mxu0
        %v734 = vadd.f32 %v612, %v733
        %v735 = vpop.f32.mrb[0].mxu0
        %v736 = vadd.f32 %v616, %v735
        %v737 = vpop.f32.mrb[0].mxu0
        %v738 = vpop.f32.mrb[0].mxu0
        %739 = vdwg.mxu0
        %v740 = vxor.u32 %v734, 2147483648
        %v741 = vxor.u32 %v736, 2147483648
        %v742 = vmul.f32 %v740, 1.442695
        %v743 = vpow.pop %v742
        %v744 = vmul.f32 %v741, 1.442695
        %v745 = vpow.pop %v744
        %v746 = vadd.f32 %v743, 1.0
        %v747 = vadd.f32 %v745, 1.0
        %v748 = vrcp.pop %v746
        %v749 = vmul.f32 1.0, %v748
        %v750 = vrcp.pop %v747
        %v751 = vmul.f32 1.0, %v750
        %v752 = vld [vmem:[%s359] sm:$0xff]
        %v753 = vld [vmem:[%s359 + $0x8] sm:$0xff]
        %vm754 = vcmp.gt.f32.partialorder %v749, %v752
        %vm755 = vcmp.gt.f32.partialorder %v751, %v753
        %v756 = vsel %vm754, 1, 0
        %v757 = vsel %vm755, 1, 0
        %v758 = vcvt.s32.f32 %v756
        %v759 = vcvt.s32.f32 %v757
        %v760 = vpack.c.bf16 %v758, %v758
        %v761 = vpack.c.bf16 %v759, %v759
        %762 = vmatprep.subr.bf16.mxu0 0
        %763 = vmatpush1.bf16.msra.mxu0 %v525
        %764 = vmatprep.subr.bf16.mxu0 0
        %765 = vmatpush1.bf16.msra.mxu0 %v526
        %766 = vmatprep.subr.bf16.mxu0 0
        %767 = vmatpush1.bf16.msra.mxu0 %v527
        %768 = vmatprep.subr.bf16.mxu0 0
        %769 = vmatpush1.bf16.msra.mxu0 %v528
        %770 = vmatprep.subr.bf16.mxu0 0
        %771 = vmatpush1.bf16.msra.mxu0 %v529
        %772 = vmatprep.subr.bf16.mxu0 0
        %773 = vmatpush1.bf16.msra.mxu0 %v530
        %774 = vmatprep.subr.bf16.mxu0 0
        %775 = vmatpush1.bf16.msra.mxu0 %v531
        %776 = vmatprep.subr.bf16.mxu0 0
        %777 = vmatpush1.bf16.msra.mxu0 %v532
        %778 = vmatprep.subr.bf16.mxu0 0
        %779 = vmatpush1.bf16.msra.mxu0 %v533
        %780 = vmatprep.subr.bf16.mxu0 0
        %781 = vmatpush1.bf16.msra.mxu0 %v534
        %782 = vmatprep.subr.bf16.mxu0 0
        %783 = vmatpush1.bf16.msra.mxu0 %v535
        %784 = vmatprep.subr.bf16.mxu0 0
        %785 = vmatpush1.bf16.msra.mxu0 %v536
        %786 = vmatprep.subr.bf16.mxu0 0
        %787 = vmatpush1.bf16.msra.mxu0 %v537
        %788 = vmatprep.subr.bf16.mxu0 0
        %789 = vmatpush1.bf16.msra.mxu0 %v538
        %790 = vmatprep.subr.bf16.mxu0 0
        %791 = vmatpush1.bf16.msra.mxu0 %v539
        %792 = vmatprep.subr.bf16.mxu0 0
        %793 = vmatpush1.bf16.msra.mxu0 %v540
        %794 = vmatprep.mubr.bf16.mxu0 %v761
        %795 = vmatmul.mubr.bf16.gmra.mrb[0].mxu0 %v760
        %v796 = vpop.f32.mrb[0].mxu0
        %v797 = vadd.f32 %v459, %v796
        %v798 = vpop.f32.mrb[0].mxu0
        %v799 = vpop.f32.mrb[0].mxu0
        %v800 = vpop.f32.mrb[0].mxu0
        %801 = vdwg.mxu0
        %v802 = vxor.u32 %v797, 2147483648
        %v803 = vmul.f32 %v802, 1.442695
        %v804 = vpow.pop %v803
        %v805 = vadd.f32 %v804, 1.0
        %v806 = vrcp.pop %v805
        %v807 = vmul.f32 1.0, %v806
        %s808 = scalar_lea.vmem %s350, 8 [#allocation8]
        %v809 = vld [vmem:[%s808] sm:$0xff]
        %vm810 = vcmp.gt.f32.partialorder %v807, %v809
        %v811 = vsel %vm810, 1, 0
        %v812 = vcvt.s32.f32 %v811
        %v813 = vpack.c.bf16 %v812, %v812
        %814 = vmatprep.subr.bf16.mxu0 %v668
        %815 = vmatpush1.bf16.msra.mxu0 %v667
        %816 = vmatprep.subr.bf16.mxu0 %v670
        %817 = vmatpush1.bf16.msra.mxu0 %v669
        %818 = vmatprep.subr.bf16.mxu0 %v672
        %819 = vmatpush1.bf16.msra.mxu0 %v671
        %820 = vmatprep.subr.bf16.mxu0 %v674
        %821 = vmatpush1.bf16.msra.mxu0 %v673
        %822 = vmatprep.subr.bf16.mxu0 %v676
        %823 = vmatpush1.bf16.msra.mxu0 %v675
        %824 = vmatprep.subr.bf16.mxu0 %v678
        %825 = vmatpush1.bf16.msra.mxu0 %v677
        %826 = vmatprep.subr.bf16.mxu0 %v680
        %827 = vmatpush1.bf16.msra.mxu0 %v679
        %828 = vmatprep.subr.bf16.mxu0 %v682
        %829 = vmatpush1.bf16.msra.mxu0 %v681
        %830 = vmatprep.subr.bf16.mxu0 0
        %831 = vmatpush1.bf16.msra.mxu0 0
        %832 = vmatprep.subr.bf16.mxu0 0
        %833 = vmatpush1.bf16.msra.mxu0 0
        %834 = vmatprep.subr.bf16.mxu0 0
        %835 = vmatpush1.bf16.msra.mxu0 0
        %836 = vmatprep.subr.bf16.mxu0 0
        %837 = vmatpush1.bf16.msra.mxu0 0
        %838 = vmatprep.subr.bf16.mxu0 0
        %839 = vmatpush1.bf16.msra.mxu0 0
        %840 = vmatprep.subr.bf16.mxu0 0
        %841 = vmatpush1.bf16.msra.mxu0 0
        %842 = vmatprep.subr.bf16.mxu0 0
        %843 = vmatpush1.bf16.msra.mxu0 0
        %844 = vmatprep.subr.bf16.mxu0 0
        %845 = vmatpush1.bf16.msra.mxu0 0
        %846 = vmatprep.mubr.bf16.mxu0 0
        %847 = vmatmul.mubr.bf16.gmra.mrb[0].mxu0 %v813
        %v848 = vpop.f32.mrb[0].mxu0
        %v849 = vadd.f32 %v612, %v848
        %v850 = vpop.f32.mrb[0].mxu0
        %v851 = vadd.f32 %v616, %v850
        %v852 = vpop.f32.mrb[0].mxu0
        %v853 = vpop.f32.mrb[0].mxu0
        %854 = vdwg.mxu0
        %v855 = vxor.u32 %v849, 2147483648
        %v856 = vxor.u32 %v851, 2147483648
        %v857 = vmul.f32 %v855, 1.442695
        %v858 = vpow.pop %v857
        %v859 = vmul.f32 %v856, 1.442695
        %v860 = vpow.pop %v859
        %v861 = vadd.f32 %v858, 1.0
        %v862 = vadd.f32 %v860, 1.0
        %v863 = vrcp.pop %v861
        %v864 = vmul.f32 1.0, %v863
        %v865 = vrcp.pop %v862
        %v866 = vmul.f32 1.0, %v865
        %s867 = scalar_lea.vmem %s359, 16 [#allocation10]
        %v868 = vld [vmem:[%s867] sm:$0xff]
        %v869 = vld [vmem:[%s867 + $0x8] sm:$0xff]
        %vm870 = vcmp.gt.f32.partialorder %v864, %v868
        %vm871 = vcmp.gt.f32.partialorder %v866, %v869
        %v872 = vsel %vm870, 1, 0
        %v873 = vsel %vm871, 1, 0
        %v874 = vcvt.s32.f32 %v872
        %v875 = vcvt.s32.f32 %v873
        %v876 = vpack.c.bf16 %v874, %v874
        %v877 = vpack.c.bf16 %v875, %v875
        %878 = vmatprep.subr.bf16.mxu0 0
        %879 = vmatpush1.bf16.msra.mxu0 %v525
        %880 = vmatprep.subr.bf16.mxu0 0
        %881 = vmatpush1.bf16.msra.mxu0 %v526
        %882 = vmatprep.subr.bf16.mxu0 0
        %883 = vmatpush1.bf16.msra.mxu0 %v527
        %884 = vmatprep.subr.bf16.mxu0 0
        %885 = vmatpush1.bf16.msra.mxu0 %v528
        %886 = vmatprep.subr.bf16.mxu0 0
        %887 = vmatpush1.bf16.msra.mxu0 %v529
        %888 = vmatprep.subr.bf16.mxu0 0
        %889 = vmatpush1.bf16.msra.mxu0 %v530
        %890 = vmatprep.subr.bf16.mxu0 0
        %891 = vmatpush1.bf16.msra.mxu0 %v531
        %892 = vmatprep.subr.bf16.mxu0 0
        %893 = vmatpush1.bf16.msra.mxu0 %v532
        %894 = vmatprep.subr.bf16.mxu0 0
        %895 = vmatpush1.bf16.msra.mxu0 %v533
        %896 = vmatprep.subr.bf16.mxu0 0
        %897 = vmatpush1.bf16.msra.mxu0 %v534
        %898 = vmatprep.subr.bf16.mxu0 0
        %899 = vmatpush1.bf16.msra.mxu0 %v535
        %900 = vmatprep.subr.bf16.mxu0 0
        %901 = vmatpush1.bf16.msra.mxu0 %v536
        %902 = vmatprep.subr.bf16.mxu0 0
        %903 = vmatpush1.bf16.msra.mxu0 %v537
        %904 = vmatprep.subr.bf16.mxu0 0
        %905 = vmatpush1.bf16.msra.mxu0 %v538
        %906 = vmatprep.subr.bf16.mxu0 0
        %907 = vmatpush1.bf16.msra.mxu0 %v539
        %908 = vmatprep.subr.bf16.mxu0 0
        %909 = vmatpush1.bf16.msra.mxu0 %v540
        %910 = vmatprep.mubr.bf16.mxu0 %v877
        %911 = vmatmul.mubr.bf16.gmra.mrb[0].mxu0 %v876
        %v912 = vpop.f32.mrb[0].mxu0
        %v913 = vadd.f32 %v459, %v912
        %v914 = vpop.f32.mrb[0].mxu0
        %v915 = vpop.f32.mrb[0].mxu0
        %v916 = vpop.f32.mrb[0].mxu0
        %917 = vdwg.mxu0
        %v918 = vxor.u32 %v913, 2147483648
        %v919 = vmul.f32 %v918, 1.442695
        %v920 = vpow.pop %v919
        %v921 = vadd.f32 %v920, 1.0
        %v922 = vrcp.pop %v921
        %v923 = vmul.f32 1.0, %v922
        %s924 = scalar_lea.vmem %s350, 16 [#allocation8]
        %v925 = vld [vmem:[%s924] sm:$0xff]
        %vm926 = vcmp.gt.f32.partialorder %v923, %v925
        %v927 = vsel %vm926, 1, 0
        %v928 = vcvt.s32.f32 %v927
        %v929 = vpack.c.bf16 %v928, %v928
        %930 = vmatprep.subr.bf16.mxu0 %v668
        %931 = vmatpush1.bf16.msra.mxu0 %v667
        %932 = vmatprep.subr.bf16.mxu0 %v670
        %933 = vmatpush1.bf16.msra.mxu0 %v669
        %934 = vmatprep.subr.bf16.mxu0 %v672
        %935 = vmatpush1.bf16.msra.mxu0 %v671
        %936 = vmatprep.subr.bf16.mxu0 %v674
        %937 = vmatpush1.bf16.msra.mxu0 %v673
        %938 = vmatprep.subr.bf16.mxu0 %v676
        %939 = vmatpush1.bf16.msra.mxu0 %v675
        %940 = vmatprep.subr.bf16.mxu0 %v678
        %941 = vmatpush1.bf16.msra.mxu0 %v677
        %942 = vmatprep.subr.bf16.mxu0 %v680
        %943 = vmatpush1.bf16.msra.mxu0 %v679
        %944 = vmatprep.subr.bf16.mxu0 %v682
        %945 = vmatpush1.bf16.msra.mxu0 %v681
        %946 = vmatprep.subr.bf16.mxu0 0
        %947 = vmatpush1.bf16.msra.mxu0 0
        %948 = vmatprep.subr.bf16.mxu0 0
        %949 = vmatpush1.bf16.msra.mxu0 0
        %950 = vmatprep.subr.bf16.mxu0 0
        %951 = vmatpush1.bf16.msra.mxu0 0
        %952 = vmatprep.subr.bf16.mxu0 0
        %953 = vmatpush1.bf16.msra.mxu0 0
        %954 = vmatprep.subr.bf16.mxu0 0
        %955 = vmatpush1.bf16.msra.mxu0 0
        %956 = vmatprep.subr.bf16.mxu0 0
        %957 = vmatpush1.bf16.msra.mxu0 0
        %958 = vmatprep.subr.bf16.mxu0 0
        %959 = vmatpush1.bf16.msra.mxu0 0
        %960 = vmatprep.subr.bf16.mxu0 0
        %961 = vmatpush1.bf16.msra.mxu0 0
        %962 = vmatprep.mubr.bf16.mxu0 0
        %963 = vmatmul.mubr.bf16.gmra.mrb[0].mxu0 %v929
        %v964 = vpop.f32.mrb[0].mxu0
        %v965 = vadd.f32 %v612, %v964
        %v966 = vpop.f32.mrb[0].mxu0
        %v967 = vadd.f32 %v616, %v966
        %v968 = vpop.f32.mrb[0].mxu0
        %v969 = vpop.f32.mrb[0].mxu0
        %970 = vdwg.mxu0
        %v971 = vxor.u32 %v965, 2147483648
        %v972 = vxor.u32 %v967, 2147483648
        %v973 = vmul.f32 %v971, 1.442695
        %v974 = vpow.pop %v973
        %v975 = vmul.f32 %v972, 1.442695
        %v976 = vpow.pop %v975
        %v977 = vadd.f32 %v974, 1.0
        %v978 = vadd.f32 %v976, 1.0
        %v979 = vrcp.pop %v977
        %v980 = vmul.f32 1.0, %v979
        %v981 = vrcp.pop %v978
        %v982 = vmul.f32 1.0, %v981
        %s983 = scalar_lea.vmem %s359, 32 [#allocation10]
        %v984 = vld [vmem:[%s983] sm:$0xff]
        %v985 = vld [vmem:[%s983 + $0x8] sm:$0xff]
        %vm986 = vcmp.gt.f32.partialorder %v980, %v984
        %vm987 = vcmp.gt.f32.partialorder %v982, %v985
        %v988 = vsel %vm986, 1, 0
        %v989 = vsel %vm987, 1, 0
        %v990 = vcvt.s32.f32 %v988
        %v991 = vcvt.s32.f32 %v989
        %v992 = vpack.c.bf16 %v990, %v990
        %v993 = vpack.c.bf16 %v991, %v991
        %994 = vmatprep.subr.bf16.mxu0 0
        %995 = vmatpush1.bf16.msra.mxu0 %v525
        %996 = vmatprep.subr.bf16.mxu0 0
        %997 = vmatpush1.bf16.msra.mxu0 %v526
        %998 = vmatprep.subr.bf16.mxu0 0
        %999 = vmatpush1.bf16.msra.mxu0 %v527
        %1000 = vmatprep.subr.bf16.mxu0 0
        %1001 = vmatpush1.bf16.msra.mxu0 %v528
        %1002 = vmatprep.subr.bf16.mxu0 0
        %1003 = vmatpush1.bf16.msra.mxu0 %v529
        %1004 = vmatprep.subr.bf16.mxu0 0
        %1005 = vmatpush1.bf16.msra.mxu0 %v530
        %1006 = vmatprep.subr.bf16.mxu0 0
        %1007 = vmatpush1.bf16.msra.mxu0 %v531
        %1008 = vmatprep.subr.bf16.mxu0 0
        %1009 = vmatpush1.bf16.msra.mxu0 %v532
        %1010 = vmatprep.subr.bf16.mxu0 0
        %1011 = vmatpush1.bf16.msra.mxu0 %v533
        %1012 = vmatprep.subr.bf16.mxu0 0
        %1013 = vmatpush1.bf16.msra.mxu0 %v534
        %1014 = vmatprep.subr.bf16.mxu0 0
        %1015 = vmatpush1.bf16.msra.mxu0 %v535
        %1016 = vmatprep.subr.bf16.mxu0 0
        %1017 = vmatpush1.bf16.msra.mxu0 %v536
        %1018 = vmatprep.subr.bf16.mxu0 0
        %1019 = vmatpush1.bf16.msra.mxu0 %v537
        %1020 = vmatprep.subr.bf16.mxu0 0
        %1021 = vmatpush1.bf16.msra.mxu0 %v538
        %1022 = vmatprep.subr.bf16.mxu0 0
        %1023 = vmatpush1.bf16.msra.mxu0 %v539
        %1024 = vmatprep.subr.bf16.mxu0 0
        %1025 = vmatpush1.bf16.msra.mxu0 %v540
        %1026 = vmatprep.mubr.bf16.mxu0 %v993
        %1027 = vmatmul.mubr.bf16.gmra.mrb[0].mxu0 %v992
        %v1028 = vpop.f32.mrb[0].mxu0
        %v1029 = vadd.f32 %v459, %v1028
        %v1030 = vpop.f32.mrb[0].mxu0
        %v1031 = vpop.f32.mrb[0].mxu0
        %v1032 = vpop.f32.mrb[0].mxu0
        %1033 = vdwg.mxu0
        %v1034 = vxor.u32 %v1029, 2147483648
        %v1035 = vmul.f32 %v1034, 1.442695
        %v1036 = vpow.pop %v1035
        %v1037 = vadd.f32 %v1036, 1.0
        %v1038 = vrcp.pop %v1037
        %v1039 = vmul.f32 1.0, %v1038
        %s1040 = scalar_lea.vmem %s350, 24 [#allocation8]
        %v1041 = vld [vmem:[%s1040] sm:$0xff]
        %vm1042 = vcmp.gt.f32.partialorder %v1039, %v1041
        %v1043 = vsel %vm1042, 1, 0
        %v1044 = vcvt.s32.f32 %v1043
        %v1045 = vpack.c.bf16 %v1044, %v1044
        %1046 = vmatprep.subr.bf16.mxu0 %v668
        %1047 = vmatpush1.bf16.msra.mxu0 %v667
        %1048 = vmatprep.subr.bf16.mxu0 %v670
        %1049 = vmatpush1.bf16.msra.mxu0 %v669
        %1050 = vmatprep.subr.bf16.mxu0 %v672
        %1051 = vmatpush1.bf16.msra.mxu0 %v671
        %1052 = vmatprep.subr.bf16.mxu0 %v674
        %1053 = vmatpush1.bf16.msra.mxu0 %v673
        %1054 = vmatprep.subr.bf16.mxu0 %v676
        %1055 = vmatpush1.bf16.msra.mxu0 %v675
        %1056 = vmatprep.subr.bf16.mxu0 %v678
        %1057 = vmatpush1.bf16.msra.mxu0 %v677
        %1058 = vmatprep.subr.bf16.mxu0 %v680
        %1059 = vmatpush1.bf16.msra.mxu0 %v679
        %1060 = vmatprep.subr.bf16.mxu0 %v682
        %1061 = vmatpush1.bf16.msra.mxu0 %v681
        %1062 = vmatprep.subr.bf16.mxu0 0
        %1063 = vmatpush1.bf16.msra.mxu0 0
        %1064 = vmatprep.subr.bf16.mxu0 0
        %1065 = vmatpush1.bf16.msra.mxu0 0
        %1066 = vmatprep.subr.bf16.mxu0 0
        %1067 = vmatpush1.bf16.msra.mxu0 0
        %1068 = vmatprep.subr.bf16.mxu0 0
        %1069 = vmatpush1.bf16.msra.mxu0 0
        %1070 = vmatprep.subr.bf16.mxu0 0
        %1071 = vmatpush1.bf16.msra.mxu0 0
        %1072 = vmatprep.subr.bf16.mxu0 0
        %1073 = vmatpush1.bf16.msra.mxu0 0
        %1074 = vmatprep.subr.bf16.mxu0 0
        %1075 = vmatpush1.bf16.msra.mxu0 0
        %1076 = vmatprep.subr.bf16.mxu0 0
        %1077 = vmatpush1.bf16.msra.mxu0 0
        %1078 = vmatprep.mubr.bf16.mxu0 0
        %1079 = vmatmul.mubr.bf16.gmra.mrb[0].mxu0 %v1045
        %v1080 = vpop.f32.mrb[0].mxu0
        %v1081 = vadd.f32 %v612, %v1080
        %v1082 = vpop.f32.mrb[0].mxu0
        %v1083 = vadd.f32 %v616, %v1082
        %v1084 = vpop.f32.mrb[0].mxu0
        %v1085 = vpop.f32.mrb[0].mxu0
        %1086 = vdwg.mxu0
        %v1087 = vxor.u32 %v1081, 2147483648
        %v1088 = vxor.u32 %v1083, 2147483648
        %v1089 = vmul.f32 %v1087, 1.442695
        %v1090 = vpow.pop %v1089
        %v1091 = vmul.f32 %v1088, 1.442695
        %v1092 = vpow.pop %v1091
        %v1093 = vadd.f32 %v1090, 1.0
        %v1094 = vadd.f32 %v1092, 1.0
        %v1095 = vrcp.pop %v1093
        %v1096 = vmul.f32 1.0, %v1095
        %v1097 = vrcp.pop %v1094
        %v1098 = vmul.f32 1.0, %v1097
        %s1099 = scalar_lea.vmem %s359, 48 [#allocation10]
        %v1100 = vld [vmem:[%s1099] sm:$0xff]
        %v1101 = vld [vmem:[%s1099 + $0x8] sm:$0xff]
        %vm1102 = vcmp.gt.f32.partialorder %v1096, %v1100
        %vm1103 = vcmp.gt.f32.partialorder %v1098, %v1101
        %v1104 = vsel %vm1102, 1, 0
        %v1105 = vsel %vm1103, 1, 0
        %v1106 = vcvt.s32.f32 %v1104
        %v1107 = vcvt.s32.f32 %v1105
        %v1108 = vpack.c.bf16 %v1106, %v1106
        %v1109 = vpack.c.bf16 %v1107, %v1107
        %1110 = vmatprep.subr.bf16.mxu0 0
        %1111 = vmatpush1.bf16.msra.mxu0 %v525
        %1112 = vmatprep.subr.bf16.mxu0 0
        %1113 = vmatpush1.bf16.msra.mxu0 %v526
        %1114 = vmatprep.subr.bf16.mxu0 0
        %1115 = vmatpush1.bf16.msra.mxu0 %v527
        %1116 = vmatprep.subr.bf16.mxu0 0
        %1117 = vmatpush1.bf16.msra.mxu0 %v528
        %1118 = vmatprep.subr.bf16.mxu0 0
        %1119 = vmatpush1.bf16.msra.mxu0 %v529
        %1120 = vmatprep.subr.bf16.mxu0 0
        %1121 = vmatpush1.bf16.msra.mxu0 %v530
        %1122 = vmatprep.subr.bf16.mxu0 0
        %1123 = vmatpush1.bf16.msra.mxu0 %v531
        %1124 = vmatprep.subr.bf16.mxu0 0
        %1125 = vmatpush1.bf16.msra.mxu0 %v532
        %1126 = vmatprep.subr.bf16.mxu0 0
        %1127 = vmatpush1.bf16.msra.mxu0 %v533
        %1128 = vmatprep.subr.bf16.mxu0 0
        %1129 = vmatpush1.bf16.msra.mxu0 %v534
        %1130 = vmatprep.subr.bf16.mxu0 0
        %1131 = vmatpush1.bf16.msra.mxu0 %v535
        %1132 = vmatprep.subr.bf16.mxu0 0
        %1133 = vmatpush1.bf16.msra.mxu0 %v536
        %1134 = vmatprep.subr.bf16.mxu0 0
        %1135 = vmatpush1.bf16.msra.mxu0 %v537
        %1136 = vmatprep.subr.bf16.mxu0 0
        %1137 = vmatpush1.bf16.msra.mxu0 %v538
        %1138 = vmatprep.subr.bf16.mxu0 0
        %1139 = vmatpush1.bf16.msra.mxu0 %v539
        %1140 = vmatprep.subr.bf16.mxu0 0
        %1141 = vmatpush1.bf16.msra.mxu0 %v540
        %1142 = vmatprep.mubr.bf16.mxu0 %v1109
        %1143 = vmatmul.mubr.bf16.gmra.mrb[0].mxu0 %v1108
        %v1144 = vpop.f32.mrb[0].mxu0
        %v1145 = vadd.f32 %v459, %v1144
        %v1146 = vpop.f32.mrb[0].mxu0
        %v1147 = vpop.f32.mrb[0].mxu0
        %v1148 = vpop.f32.mrb[0].mxu0
        %1149 = vdwg.mxu0
        %v1150 = vxor.u32 %v1145, 2147483648
        %v1151 = vmul.f32 %v1150, 1.442695
        %v1152 = vpow.pop %v1151
        %v1153 = vadd.f32 %v1152, 1.0
        %v1154 = vrcp.pop %v1153
        %v1155 = vmul.f32 1.0, %v1154
        %s1156 = scalar_lea.vmem %s350, 32 [#allocation8]
        %v1157 = vld [vmem:[%s1156] sm:$0xff]
        %vm1158 = vcmp.gt.f32.partialorder %v1155, %v1157
        %v1159 = vsel %vm1158, 1, 0
        %v1160 = vcvt.s32.f32 %v1159
        %v1161 = vpack.c.bf16 %v1160, %v1160
        %1162 = vmatprep.subr.bf16.mxu0 %v668
        %1163 = vmatpush1.bf16.msra.mxu0 %v667
        %1164 = vmatprep.subr.bf16.mxu0 %v670
        %1165 = vmatpush1.bf16.msra.mxu0 %v669
        %1166 = vmatprep.subr.bf16.mxu0 %v672
        %1167 = vmatpush1.bf16.msra.mxu0 %v671
        %1168 = vmatprep.subr.bf16.mxu0 %v674
        %1169 = vmatpush1.bf16.msra.mxu0 %v673
        %1170 = vmatprep.subr.bf16.mxu0 %v676
        %1171 = vmatpush1.bf16.msra.mxu0 %v675
        %1172 = vmatprep.subr.bf16.mxu0 %v678
        %1173 = vmatpush1.bf16.msra.mxu0 %v677
        %1174 = vmatprep.subr.bf16.mxu0 %v680
        %1175 = vmatpush1.bf16.msra.mxu0 %v679
        %1176 = vmatprep.subr.bf16.mxu0 %v682
        %1177 = vmatpush1.bf16.msra.mxu0 %v681
        %1178 = vmatprep.subr.bf16.mxu0 0
        %1179 = vmatpush1.bf16.msra.mxu0 0
        %1180 = vmatprep.subr.bf16.mxu0 0
        %1181 = vmatpush1.bf16.msra.mxu0 0
        %1182 = vmatprep.subr.bf16.mxu0 0
        %1183 = vmatpush1.bf16.msra.mxu0 0
        %1184 = vmatprep.subr.bf16.mxu0 0
        %1185 = vmatpush1.bf16.msra.mxu0 0
        %1186 = vmatprep.subr.bf16.mxu0 0
        %1187 = vmatpush1.bf16.msra.mxu0 0
        %1188 = vmatprep.subr.bf16.mxu0 0
        %1189 = vmatpush1.bf16.msra.mxu0 0
        %1190 = vmatprep.subr.bf16.mxu0 0
        %1191 = vmatpush1.bf16.msra.mxu0 0
        %1192 = vmatprep.subr.bf16.mxu0 0
        %1193 = vmatpush1.bf16.msra.mxu0 0
        %1194 = vmatprep.mubr.bf16.mxu0 0
        %1195 = vmatmul.mubr.bf16.gmra.mrb[0].mxu0 %v1161
        %v1196 = vpop.f32.mrb[0].mxu0
        %v1197 = vadd.f32 %v612, %v1196
        %v1198 = vpop.f32.mrb[0].mxu0
        %v1199 = vadd.f32 %v616, %v1198
        %v1200 = vpop.f32.mrb[0].mxu0
        %v1201 = vpop.f32.mrb[0].mxu0
        %1202 = vdwg.mxu0
        %v1203 = vxor.u32 %v1197, 2147483648
        %v1204 = vxor.u32 %v1199, 2147483648
        %v1205 = vmul.f32 %v1203, 1.442695
        %v1206 = vpow.pop %v1205
        %v1207 = vmul.f32 %v1204, 1.442695
        %v1208 = vpow.pop %v1207
        %v1209 = vadd.f32 %v1206, 1.0
        %v1210 = vadd.f32 %v1208, 1.0
        %v1211 = vrcp.pop %v1209
        %v1212 = vmul.f32 1.0, %v1211
        %v1213 = vrcp.pop %v1210
        %v1214 = vmul.f32 1.0, %v1213
        %s1215 = scalar_lea.vmem %s359, 64 [#allocation10]
        %v1216 = vld [vmem:[%s1215] sm:$0xff]
        %v1217 = vld [vmem:[%s1215 + $0x8] sm:$0xff]
        %vm1218 = vcmp.gt.f32.partialorder %v1212, %v1216
        %vm1219 = vcmp.gt.f32.partialorder %v1214, %v1217
        %v1220 = vsel %vm1218, 1, 0
        %v1221 = vsel %vm1219, 1, 0
        %v1222 = vcvt.s32.f32 %v1220
        %v1223 = vcvt.s32.f32 %v1221
        %v1224 = vpack.c.bf16 %v1222, %v1222
        %v1225 = vpack.c.bf16 %v1223, %v1223
        %v1226 = vunpack.c.l.bf16 %v1224
        %v1227 = vunpack.c.l.bf16 %v1225
        %1228 = vst [vmem:[%s399] sm:$0xff] %v1226
        %1229 = vst [vmem:[%s399 + $0x8] sm:$0xff] %v1227
        %s1230 = sand.u32 %s198, 1
        %s1231 = scalar_lea.sflag [#allocation4], %s1230
        %s1232 = sand.u32 %s198, 1
        %s1233 = smul.addr %s1232, 16
        %s1234 = scalar_lea.vmem [#allocation11], %s1233
        // Predicated region
        $region69: #{tpu_custom_call.1} parent=47 // pred_check
          %p1235 = pneg %p208
        $region70: #{tpu_custom_call.1} parent=47 // pred_check_branch
          %1237 = sbr.rel (%p1235) target = $region72
        $region71: #{tpu_custom_call.1} parent=47 // pred_region
          %s1239 = ssub.s32 256, 256
          %1240 = vsyncadd %s1231, %s1239
          %s1241 = smul.addr %s28, 2
          %s1242 = smul.addr %s1241, 128
          %s1243 = scalar_lea.hbm %s7, %s1242
          %s1245 = sshll.u32 %s1234, 4
          %s1246 = int_to_ptr.vmem [resolvable:$true] %s1245
          %1248 = dma.vmem_to_hbm [thread:$0]  %s1246, 256, %s1243, %s1231
        $region72: #{tpu_custom_call.1} parent=47 // pred_fallthru
          _
      $region48: #{tpu_custom_call.1} parent=5 // pred_fallthru
        _
      %p1249 = scmp.le.s32.totalorder 2, %s23
      // Predicated region
      $region73: #{tpu_custom_call.1} parent=5 // pred_check
        %p1250 = pneg %p1249
      $region74: #{tpu_custom_call.1} parent=5 // pred_check_branch
        %1252 = sbr.rel (%p1250) target = $region76
      $region75: #{tpu_custom_call.1} parent=5 // pred_region
        %s1253 = ssub.s32 %s23, 2
        // Predicated region
        $region77: #{tpu_custom_call.1} parent=75 // pred_check
          %p1254 = pneg %p214
        $region78: #{tpu_custom_call.1} parent=75 // pred_check_branch
          %1256 = sbr.rel (%p1254) target = $region80
        $region79: #{tpu_custom_call.1} parent=75 // pred_region
          %s1257 = sand.u32 %s199, 1
          %s1258 = scalar_lea.sflag [#allocation4], %s1257
          %s1259 = sand.u32 %s199, 1
          %s1260 = smul.addr %s1259, 16
          %s1261 = scalar_lea.vmem [#allocation11], %s1260
          %1262 = dma.done %s1258, 256
        $region80: #{tpu_custom_call.1} parent=75 // pred_fallthru
          _
      $region76: #{tpu_custom_call.1} parent=5 // pred_fallthru
        _
    $region6: #{tpu_custom_call.1} parent=1 // loop_footer
      %s27 = sadd.s32 1, %s23
    $region7: #{tpu_custom_call.1} parent=1 // loop_footer_branch
      %22 = sbr.rel target = $region3
    $region8: #{tpu_custom_call.1} parent=1 // loop_exit
      _
    %1263 = vsyncpa [#allocation3], 1
    %s1264 = scalar_lea.sflag [#allocation3], 1
    %1265 = vsyncpa %s1264, 1
    %1266 = vsyncpa [#allocation6], 1
    %1267 = vsyncpa [#allocation9], 1
    %s1268 = scalar_lea.sflag [#allocation9], 1
    %1269 = vsyncpa %s1268, 1
    %1270 = vsyncpa [#allocation4], 1
    %s1271 = scalar_lea.sflag [#allocation4], 1
    %1272 = vsyncpa %s1271, 1

</llo_original>
